<compile_context>
chip_gen: v5e
topology: v5e:2x2
jax: 0.10.0
libtpu: 0.0.40
codegen_flags: <defaults>
</compile_context>

<pallas_src>
import functools

import jax
import jax.numpy as jnp
from jax import lax
from jax.experimental import pallas as pl
from jax.experimental.pallas import tpu as pltpu


def dilconv_kernel(x_ref, wf_ref, y_ref, stats_ref, xp_ref, patch_ref, *,
                   kernel_size, stride, dilation, padding, out_h, out_w,
                   row_off):
    """Fused ReLU + in-place im2col + (depthwise*pointwise) matmul for Bt images.

    x_ref     : (Bt, Cin, H, W)      unpadded NCHW input images
    wf_ref    : (Cout, k*k*Cin)      fused depthwise*pointwise weights
    y_ref     : (Bt, Cout, Ho*Wo)    conv output, spatial flattened onto lanes
    stats_ref : (1, Cout, 2)         per-block [sum, sum-of-squares] (BN stats)
    xp_ref    : VMEM scratch (Bt, Cin, PH, PW)  zero-padded, ReLU'd images
    patch_ref : VMEM scratch (k*k*Cin, Bt*Ho*Wo) im2col matrix
    """
    bt, cin, h, w = x_ref.shape
    ph, pw = xp_ref.shape[2], xp_ref.shape[3]
    howo = out_h * out_w

    # --- zero ONLY the border strips of the padded scratch.  The interior is
    #     fully overwritten by the image store below, so a full clear (or a
    #     once-per-grid clear) is unnecessary; strips are a few KiB vs. the
    #     old full-scratch vst every step.
    if padding > 0:
        zrow = jnp.zeros((bt, cin, padding, pw), jnp.float32)
        xp_ref[:, :, row_off - padding:row_off, :] = zrow                 # top
        xp_ref[:, :, row_off + h:row_off + h + padding, :] = zrow         # bottom
        zcol = jnp.zeros((bt, cin, ph, padding), jnp.float32)
        xp_ref[:, :, :, 0:padding] = zcol                                 # left
        xp_ref[:, :, :, padding + w:padding + w + padding] = zcol         # right

    # --- ReLU + place images at (8-sublane-aligned row, `padding` lane) offset
    xp_ref[:, :, row_off:row_off + h, padding:padding + w] = jnp.maximum(
        x_ref[...].astype(jnp.float32), 0.0)

    # --- build im2col in place: rows ordered (ki, kj, c), cols (b, pixel).
    #     Per-tap ref slices keep vreg pressure bounded (no whole-image load).
    hspan = (out_h - 1) * stride + 1
    wspan = (out_w - 1) * stride + 1
    for ki in range(kernel_size):
        for kj in range(kernel_size):
            tap = ki * kernel_size + kj
            h0 = row_off - padding + ki * dilation
            w0 = kj * dilation
            for b in range(bt):
                win = xp_ref[b, :, h0:h0 + hspan, w0:w0 + wspan]
                if stride > 1:
                    # NOTE: strided lane selects are correct but slow; the
                    # common DilConv configs here use stride == 1.
                    win = win[:, ::stride, ::stride]
                patch_ref[tap * cin:(tap + 1) * cin,
                          b * howo:(b + 1) * howo] = win.reshape(cin, howo)

    # --- single MXU matmul over the fused contraction K = k*k*Cin.
    y2d = jnp.dot(wf_ref[...], patch_ref[...],
                  preferred_element_type=jnp.float32)      # (Cout, Bt*Ho*Wo)

    for b in range(bt):
        y_ref[b] = y2d[:, b * howo:(b + 1) * howo].astype(y_ref.dtype)

    # --- per-block per-channel BN partial statistics, one merged output
    #     (single small store/DMA instead of two last-dim-1 outputs).
    ssum = jnp.sum(y2d, axis=1, keepdims=True)              # (Cout, 1)
    ssq = jnp.sum(y2d * y2d, axis=1, keepdims=True)         # (Cout, 1)
    stats_ref[0] = jnp.concatenate([ssum, ssq], axis=1)     # (Cout, 2)


def bn_apply_kernel(y_ref, scale_ref, shift_ref, o_ref):
    """Per-channel affine BN apply over (Bt, Cout, Ho*Wo) lane-dense blocks."""
    o_ref[...] = y_ref[...] * scale_ref[...] + shift_ref[...]


def _pick_batch_tile(n, bytes_per_image, budget_bytes):
    """Largest Bt that fits the VMEM budget, divides N, and keeps >=2 grid
    steps (so both v7x TensorCores get work)."""
    bt = max(1, budget_bytes // max(1, bytes_per_image))
    if n >= 2:
        bt = min(bt, n // 2)
    bt = int(max(1, min(bt, n)))
    while n % bt:
        bt -= 1
    return bt


def _dilconv_forward(x_nchw, w_dw, w_pw, gamma, beta, *,
                     stride, padding, dilation, eps=1e-5):
    """DilConv forward. PyTorch conventions: x (N,Cin,H,W), w_dw (Cin,1,k,k),
    w_pw (Cout,Cin,1,1). Returns (N,Cout,Ho,Wo)."""
    N, Cin, H, W = x_nchw.shape
    k = w_dw.shape[-1]
    Cout = w_pw.shape[0]

    Ho = (H + 2 * padding - dilation * (k - 1) - 1) // stride + 1
    Wo = (W + 2 * padding - dilation * (k - 1) - 1) // stride + 1
    HoWo = Ho * Wo
    KK = k * k * Cin

    # Fused weight: wf[o, (ki,kj,c)] = wdw[c,ki,kj] * wpw[o,c].
    wdw_kkc = jnp.transpose(w_dw[:, 0, :, :], (1, 2, 0)).astype(jnp.float32)  # (k,k,Cin)
    wpw_oc = w_pw[:, :, 0, 0].astype(jnp.float32)                             # (Cout,Cin)
    wf = (wpw_oc[:, None, None, :] * wdw_kkc[None, :, :, :]).reshape(Cout, KK)

    # Padded-scratch geometry: sublane-aligned row offset, lane offset == padding.
    row_off = ((padding + 7) // 8) * 8
    PH = row_off + H + padding
    PW = W + 2 * padding

    # Batch tile for the conv kernel (per-image VMEM footprint of x block +
    # padded scratch + im2col columns + y block), ~6 MiB budget so the whole
    # call stays well inside v7x's 64 MiB VMEM even with double buffering.
    per_img = 4 * (Cin * H * W + Cin * PH * PW + KK * HoWo + Cout * HoWo)
    Bt = _pick_batch_tile(N, per_img, 6 << 20)
    nblk = N // Bt

    est = 2 * 4 * Bt * (Cin * H * W + Cout * HoWo) + 2 * 4 * Cout * KK \
        + 4 * (Bt * Cin * PH * PW + KK * Bt * HoWo) + 2 * 4 * Cout * 2
    vmem_limit = int(min(48 << 20, max(8 << 20, 6 * est)))

    kern = functools.partial(
        dilconv_kernel, kernel_size=k, stride=stride, dilation=dilation,
        padding=padding, out_h=Ho, out_w=Wo, row_off=row_off)

    # TODO(synk): for very large H*W / Cin (v7x, 64 MiB VMEM) add a spatial
    # (Ho row-tile) grid axis; whole-image blocks are fine at these sizes.
    conv_y, stats = pl.pallas_call(
        kern,
        out_shape=(
            jax.ShapeDtypeStruct((N, Cout, HoWo), jnp.float32),
            jax.ShapeDtypeStruct((nblk, Cout, 2), jnp.float32),
        ),
        grid=(nblk,),
        in_specs=[
            pl.BlockSpec((Bt, Cin, H, W), lambda n: (n, 0, 0, 0)),
            pl.BlockSpec((Cout, KK), lambda n: (0, 0)),
        ],
        out_specs=(
            pl.BlockSpec((Bt, Cout, HoWo), lambda n: (n, 0, 0)),
            pl.BlockSpec((1, Cout, 2), lambda n: (n, 0, 0)),
        ),
        scratch_shapes=[
            pltpu.VMEM((Bt, Cin, PH, PW), jnp.float32),
            pltpu.VMEM((KK, Bt * HoWo), jnp.float32),
        ],
        compiler_params=pltpu.CompilerParams(
            dimension_semantics=("parallel",),
            vmem_limit_bytes=vmem_limit),
    )(x_nchw.astype(jnp.float32), wf)

    # BatchNorm2d in (PyTorch default) training mode: batch statistics over
    # (N, H, W), biased variance, from the per-block partial sums -- no extra
    # HBM pass over the activation.  Single-pass E[y^2]-E[y]^2 is adequate at
    # f32 for these magnitudes (guarded against tiny negative variance).
    # TODO(synk): running_mean/running_var buffer updates (stateful training
    # bookkeeping of nn.BatchNorm2d) are not modeled.
    cnt = N * HoWo
    s1 = jnp.sum(stats[:, :, 0], axis=0)
    s2 = jnp.sum(stats[:, :, 1], axis=0)
    mean = s1 / cnt
    var = jnp.maximum(s2 / cnt - mean * mean, 0.0)
    scale = gamma.astype(jnp.float32) / jnp.sqrt(var + eps)
    shift = beta.astype(jnp.float32) - mean * scale

    # BN-apply epilogue: pure HBM read+write pass; use multi-image blocks and
    # alias the output onto the conv buffer.
    Bt_bn = _pick_batch_tile(N, 2 * 4 * Cout * HoWo, 8 << 20)
    out = pl.pallas_call(
        bn_apply_kernel,
        out_shape=jax.ShapeDtypeStruct((N, Cout, HoWo), jnp.float32),
        grid=(N // Bt_bn,),
        in_specs=[
            pl.BlockSpec((Bt_bn, Cout, HoWo), lambda n: (n, 0, 0)),
            pl.BlockSpec((Cout, 1), lambda n: (0, 0)),
            pl.BlockSpec((Cout, 1), lambda n: (0, 0)),
        ],
        out_specs=pl.BlockSpec((Bt_bn, Cout, HoWo), lambda n: (n, 0, 0)),
        input_output_aliases={0: 0},   # BN apply reuses the conv buffer in place
        compiler_params=pltpu.CompilerParams(
            dimension_semantics=("parallel",),
            vmem_limit_bytes=vmem_limit),
    )(conv_y, scale.reshape(Cout, 1), shift.reshape(Cout, 1))

    # Already NCHW with flattened spatial axis -> free metadata reshape.
    return out.reshape(N, Cout, Ho, Wo)


dilconv_forward = jax.jit(
    _dilconv_forward, static_argnames=("stride", "padding", "dilation"))


def dilconv_reference(x_nchw, w_dw, w_pw, gamma, beta, *,
                      stride, padding, dilation, eps=1e-5):
    """Pure-JAX reference matching torch semantics (NCHW)."""
    x = jnp.maximum(x_nchw.astype(jnp.float32), 0.0)
    y = lax.conv_general_dilated(
        x, w_dw.astype(jnp.float32),
        window_strides=(stride, stride),
        padding=((padding, padding), (padding, padding)),
        rhs_dilation=(dilation, dilation),
        dimension_numbers=("NCHW", "OIHW", "NCHW"),
        feature_group_count=x.shape[1])
    y = lax.conv_general_dilated(
        y, w_pw.astype(jnp.float32),
        window_strides=(1, 1), padding=((0, 0), (0, 0)),
        dimension_numbers=("NCHW", "OIHW", "NCHW"))
    mean = jnp.mean(y, axis=(0, 2, 3), keepdims=True)
    var = jnp.mean((y - mean) ** 2, axis=(0, 2, 3), keepdims=True)
    g = gamma.reshape(1, -1, 1, 1)
    b = beta.reshape(1, -1, 1, 1)
    return (y - mean) / jnp.sqrt(var + eps) * g + b


if __name__ == "__main__":
    # DilConv(in_channels=4, out_channels=8, kernel_size=3, stride=1,
    #         padding=2, dilation=2, affine=True)
    N, Cin, H, W = 2, 4, 16, 16
    Cout, K, STRIDE, PAD, DIL = 8, 3, 1, 2, 2

    key = jax.random.PRNGKey(0)
    kx, kdw, kpw, kg, kb = jax.random.split(key, 5)
    x = jax.random.normal(kx, (N, Cin, H, W), jnp.float32)
    w_dw = 0.2 * jax.random.normal(kdw, (Cin, 1, K, K), jnp.float32)       # depthwise
    w_pw = 0.2 * jax.random.normal(kpw, (Cout, Cin, 1, 1), jnp.float32)    # pointwise
    gamma = 1.0 + 0.1 * jax.random.normal(kg, (Cout,), jnp.float32)        # BN affine
    beta = 0.1 * jax.random.normal(kb, (Cout,), jnp.float32)

    out = dilconv_forward(x, w_dw, w_pw, gamma, beta,
                          stride=STRIDE, padding=PAD, dilation=DIL)
    out = jax.block_until_ready(out)

    ref = dilconv_reference(x, w_dw, w_pw, gamma, beta,
                            stride=STRIDE, padding=PAD, dilation=DIL)
    ref = jax.block_until_ready(ref)

    assert out.shape == (N, Cout, H, W), out.shape
    assert jnp.allclose(out, ref, rtol=1e-4, atol=1e-4), float(
        jnp.max(jnp.abs(out - ref)))
    print("KERNEL_OK")
</pallas_src>

<mosaic_0001>
module attributes {stable_mosaic.version = 11 : i64} {
  func.func @dilconv_kernel(%arg0: i32, %arg1: memref<1x4x16x16xf32, #tpu.memory_space<vmem>>, %arg2: memref<8x36xf32, #tpu.memory_space<vmem>>, %arg3: memref<1x8x256xf32, #tpu.memory_space<vmem>>, %arg4: memref<1x8x2xf32, #tpu.memory_space<vmem>>, %arg5: memref<1x4x26x20xf32, #tpu.memory_space<vmem>>, %arg6: memref<36x256xf32, #tpu.memory_space<vmem>>) attributes {dimension_semantics = [#tpu.dimension_semantics<parallel>], iteration_bounds = array<i64: 2>, scalar_prefetch = 0 : i64, scratch_operands = 2 : i64, tpu.core_type = #tpu.core_type<tc>, window_params = [{transform_indices = @transform_0, window_bounds = array<i64: 1, 4, 16, 16>}, {pipeline_mode = #tpu.pipeline_mode<synchronous>, transform_indices = @transform_1, window_bounds = array<i64: 8, 36>}, {transform_indices = @transform_2, window_bounds = array<i64: 1, 8, 256>}, {transform_indices = @transform_3, window_bounds = array<i64: 1, 8, 2>}]} {
    %cst = arith.constant 0.000000e+00 : f32
    %0 = vector.broadcast %cst : f32 to vector<1x4x2x20xf32>
    %c0 = arith.constant 0 : index
    %c0_0 = arith.constant 0 : index
    %c6 = arith.constant 6 : index
    %c0_1 = arith.constant 0 : index
    %1 = vector.load %arg5[%c0, %c0_0, %c6, %c0_1] : memref<1x4x26x20xf32, #tpu.memory_space<vmem>>, vector<1x4x2x20xf32>
    tpu.vector_store %arg5[%c0, %c0_0, %c6, %c0_1], %0 {strides = array<i32>} : memref<1x4x26x20xf32, #tpu.memory_space<vmem>>, vector<1x4x2x20xf32>,
    %c0_2 = arith.constant 0 : index
    %c0_3 = arith.constant 0 : index
    %c24 = arith.constant 24 : index
    %c0_4 = arith.constant 0 : index
    %2 = vector.load %arg5[%c0_2, %c0_3, %c24, %c0_4] : memref<1x4x26x20xf32, #tpu.memory_space<vmem>>, vector<1x4x2x20xf32>
    tpu.vector_store %arg5[%c0_2, %c0_3, %c24, %c0_4], %0 {strides = array<i32>} : memref<1x4x26x20xf32, #tpu.memory_space<vmem>>, vector<1x4x2x20xf32>,
    %cst_5 = arith.constant 0.000000e+00 : f32
    %3 = vector.broadcast %cst_5 : f32 to vector<1x4x26x2xf32>
    %c0_6 = arith.constant 0 : index
    %c0_7 = arith.constant 0 : index
    %c0_8 = arith.constant 0 : index
    %c0_9 = arith.constant 0 : index
    %4 = vector.load %arg5[%c0_6, %c0_7, %c0_8, %c0_9] : memref<1x4x26x20xf32, #tpu.memory_space<vmem>>, vector<1x4x26x2xf32>
    tpu.vector_store %arg5[%c0_6, %c0_7, %c0_8, %c0_9], %3 {strides = array<i32>} : memref<1x4x26x20xf32, #tpu.memory_space<vmem>>, vector<1x4x26x2xf32>,
    %c0_10 = arith.constant 0 : index
    %c0_11 = arith.constant 0 : index
    %c0_12 = arith.constant 0 : index
    %c18 = arith.constant 18 : index
    %5 = vector.load %arg5[%c0_10, %c0_11, %c0_12, %c18] : memref<1x4x26x20xf32, #tpu.memory_space<vmem>>, vector<1x4x26x2xf32>
    tpu.vector_store %arg5[%c0_10, %c0_11, %c0_12, %c18], %3 {strides = array<i32>} : memref<1x4x26x20xf32, #tpu.memory_space<vmem>>, vector<1x4x26x2xf32>,
    %c0_13 = arith.constant 0 : index
    %c0_14 = arith.constant 0 : index
    %c0_15 = arith.constant 0 : index
    %c0_16 = arith.constant 0 : index
    %6 = vector.load %arg1[%c0_13, %c0_14, %c0_15, %c0_16] : memref<1x4x16x16xf32, #tpu.memory_space<vmem>>, vector<1x4x16x16xf32>
    %cst_17 = arith.constant 0.000000e+00 : f32
    %7 = vector.broadcast %cst_17 : f32 to vector<1x4x16x16xf32>
    %8 = arith.maximumf %6, %7 : vector<1x4x16x16xf32>
    %c0_18 = arith.constant 0 : index
    %c0_19 = arith.constant 0 : index
    %c8 = arith.constant 8 : index
    %c2 = arith.constant 2 : index
    %9 = vector.load %arg5[%c0_18, %c0_19, %c8, %c2] : memref<1x4x26x20xf32, #tpu.memory_space<vmem>>, vector<1x4x16x16xf32>
    tpu.vector_store %arg5[%c0_18, %c0_19, %c8, %c2], %8 {strides = array<i32>} : memref<1x4x26x20xf32, #tpu.memory_space<vmem>>, vector<1x4x16x16xf32>,
    %c0_20 = arith.constant 0 : index
    %c0_21 = arith.constant 0 : index
    %c6_22 = arith.constant 6 : index
    %c0_23 = arith.constant 0 : index
    %10 = vector.load %arg5[%c0_20, %c0_21, %c6_22, %c0_23] : memref<1x4x26x20xf32, #tpu.memory_space<vmem>>, vector<1x4x16x16xf32>
    %11 = vector.shape_cast %10 : vector<1x4x16x16xf32> to vector<4x16x16xf32>
    %12 = vector.shape_cast %11 : vector<4x16x16xf32> to vector<4x256xf32>
    %c0_24 = arith.constant 0 : index
    %c0_25 = arith.constant 0 : index
    %13 = vector.load %arg6[%c0_24, %c0_25] : memref<36x256xf32, #tpu.memory_space<vmem>>, vector<4x256xf32>
    tpu.vector_store %arg6[%c0_24, %c0_25], %12 {strides = array<i32>} : memref<36x256xf32, #tpu.memory_space<vmem>>, vector<4x256xf32>,
    %c0_26 = arith.constant 0 : index
    %c0_27 = arith.constant 0 : index
    %c6_28 = arith.constant 6 : index
    %c2_29 = arith.constant 2 : index
    %14 = vector.load %arg5[%c0_26, %c0_27, %c6_28, %c2_29] : memref<1x4x26x20xf32, #tpu.memory_space<vmem>>, vector<1x4x16x16xf32>
    %15 = vector.shape_cast %14 : vector<1x4x16x16xf32> to vector<4x16x16xf32>
    %16 = vector.shape_cast %15 : vector<4x16x16xf32> to vector<4x256xf32>
    %c4 = arith.constant 4 : index
    %c0_30 = arith.constant 0 : index
    %17 = vector.load %arg6[%c4, %c0_30] : memref<36x256xf32, #tpu.memory_space<vmem>>, vector<4x256xf32>
    tpu.vector_store %arg6[%c4, %c0_30], %16 {strides = array<i32>} : memref<36x256xf32, #tpu.memory_space<vmem>>, vector<4x256xf32>,
    %c0_31 = arith.constant 0 : index
    %c0_32 = arith.constant 0 : index
    %c6_33 = arith.constant 6 : index
    %c4_34 = arith.constant 4 : index
    %18 = vector.load %arg5[%c0_31, %c0_32, %c6_33, %c4_34] : memref<1x4x26x20xf32, #tpu.memory_space<vmem>>, vector<1x4x16x16xf32>
    %19 = vector.shape_cast %18 : vector<1x4x16x16xf32> to vector<4x16x16xf32>
    %20 = vector.shape_cast %19 : vector<4x16x16xf32> to vector<4x256xf32>
    %c8_35 = arith.constant 8 : index
    %c0_36 = arith.constant 0 : index
    %21 = vector.load %arg6[%c8_35, %c0_36] : memref<36x256xf32, #tpu.memory_space<vmem>>, vector<4x256xf32>
    tpu.vector_store %arg6[%c8_35, %c0_36], %20 {strides = array<i32>} : memref<36x256xf32, #tpu.memory_space<vmem>>, vector<4x256xf32>,
    %c0_37 = arith.constant 0 : index
    %c0_38 = arith.constant 0 : index
    %c8_39 = arith.constant 8 : index
    %c0_40 = arith.constant 0 : index
    %22 = vector.load %arg5[%c0_37, %c0_38, %c8_39, %c0_40] : memref<1x4x26x20xf32, #tpu.memory_space<vmem>>, vector<1x4x16x16xf32>
    %23 = vector.shape_cast %22 : vector<1x4x16x16xf32> to vector<4x16x16xf32>
    %24 = vector.shape_cast %23 : vector<4x16x16xf32> to vector<4x256xf32>
    %c12 = arith.constant 12 : index
    %c0_41 = arith.constant 0 : index
    %25 = vector.load %arg6[%c12, %c0_41] : memref<36x256xf32, #tpu.memory_space<vmem>>, vector<4x256xf32>
    tpu.vector_store %arg6[%c12, %c0_41], %24 {strides = array<i32>} : memref<36x256xf32, #tpu.memory_space<vmem>>, vector<4x256xf32>,
    %c0_42 = arith.constant 0 : index
    %c0_43 = arith.constant 0 : index
    %c8_44 = arith.constant 8 : index
    %c2_45 = arith.constant 2 : index
    %26 = vector.load %arg5[%c0_42, %c0_43, %c8_44, %c2_45] : memref<1x4x26x20xf32, #tpu.memory_space<vmem>>, vector<1x4x16x16xf32>
    %27 = vector.shape_cast %26 : vector<1x4x16x16xf32> to vector<4x16x16xf32>
    %28 = vector.shape_cast %27 : vector<4x16x16xf32> to vector<4x256xf32>
    %c16 = arith.constant 16 : index
    %c0_46 = arith.constant 0 : index
    %29 = vector.load %arg6[%c16, %c0_46] : memref<36x256xf32, #tpu.memory_space<vmem>>, vector<4x256xf32>
    tpu.vector_store %arg6[%c16, %c0_46], %28 {strides = array<i32>} : memref<36x256xf32, #tpu.memory_space<vmem>>, vector<4x256xf32>,
    %c0_47 = arith.constant 0 : index
    %c0_48 = arith.constant 0 : index
    %c8_49 = arith.constant 8 : index
    %c4_50 = arith.constant 4 : index
    %30 = vector.load %arg5[%c0_47, %c0_48, %c8_49, %c4_50] : memref<1x4x26x20xf32, #tpu.memory_space<vmem>>, vector<1x4x16x16xf32>
    %31 = vector.shape_cast %30 : vector<1x4x16x16xf32> to vector<4x16x16xf32>
    %32 = vector.shape_cast %31 : vector<4x16x16xf32> to vector<4x256xf32>
    %c20 = arith.constant 20 : index
    %c0_51 = arith.constant 0 : index
    %33 = vector.load %arg6[%c20, %c0_51] : memref<36x256xf32, #tpu.memory_space<vmem>>, vector<4x256xf32>
    tpu.vector_store %arg6[%c20, %c0_51], %32 {strides = array<i32>} : memref<36x256xf32, #tpu.memory_space<vmem>>, vector<4x256xf32>,
    %c0_52 = arith.constant 0 : index
    %c0_53 = arith.constant 0 : index
    %c10 = arith.constant 10 : index
    %c0_54 = arith.constant 0 : index
    %34 = vector.load %arg5[%c0_52, %c0_53, %c10, %c0_54] : memref<1x4x26x20xf32, #tpu.memory_space<vmem>>, vector<1x4x16x16xf32>
    %35 = vector.shape_cast %34 : vector<1x4x16x16xf32> to vector<4x16x16xf32>
    %36 = vector.shape_cast %35 : vector<4x16x16xf32> to vector<4x256xf32>
    %c24_55 = arith.constant 24 : index
    %c0_56 = arith.constant 0 : index
    %37 = vector.load %arg6[%c24_55, %c0_56] : memref<36x256xf32, #tpu.memory_space<vmem>>, vector<4x256xf32>
    tpu.vector_store %arg6[%c24_55, %c0_56], %36 {strides = array<i32>} : memref<36x256xf32, #tpu.memory_space<vmem>>, vector<4x256xf32>,
    %c0_57 = arith.constant 0 : index
    %c0_58 = arith.constant 0 : index
    %c10_59 = arith.constant 10 : index
    %c2_60 = arith.constant 2 : index
    %38 = vector.load %arg5[%c0_57, %c0_58, %c10_59, %c2_60] : memref<1x4x26x20xf32, #tpu.memory_space<vmem>>, vector<1x4x16x16xf32>
    %39 = vector.shape_cast %38 : vector<1x4x16x16xf32> to vector<4x16x16xf32>
    %40 = vector.shape_cast %39 : vector<4x16x16xf32> to vector<4x256xf32>
    %c28 = arith.constant 28 : index
    %c0_61 = arith.constant 0 : index
    %41 = vector.load %arg6[%c28, %c0_61] : memref<36x256xf32, #tpu.memory_space<vmem>>, vector<4x256xf32>
    tpu.vector_store %arg6[%c28, %c0_61], %40 {strides = array<i32>} : memref<36x256xf32, #tpu.memory_space<vmem>>, vector<4x256xf32>,
    %c0_62 = arith.constant 0 : index
    %c0_63 = arith.constant 0 : index
    %c10_64 = arith.constant 10 : index
    %c4_65 = arith.constant 4 : index
    %42 = vector.load %arg5[%c0_62, %c0_63, %c10_64, %c4_65] : memref<1x4x26x20xf32, #tpu.memory_space<vmem>>, vector<1x4x16x16xf32>
    %43 = vector.shape_cast %42 : vector<1x4x16x16xf32> to vector<4x16x16xf32>
    %44 = vector.shape_cast %43 : vector<4x16x16xf32> to vector<4x256xf32>
    %c32 = arith.constant 32 : index
    %c0_66 = arith.constant 0 : index
    %45 = vector.load %arg6[%c32, %c0_66] : memref<36x256xf32, #tpu.memory_space<vmem>>, vector<4x256xf32>
    tpu.vector_store %arg6[%c32, %c0_66], %44 {strides = array<i32>} : memref<36x256xf32, #tpu.memory_space<vmem>>, vector<4x256xf32>,
    %c0_67 = arith.constant 0 : index
    %c0_68 = arith.constant 0 : index
    %46 = vector.load %arg2[%c0_67, %c0_68] : memref<8x36xf32, #tpu.memory_space<vmem>>, vector<8x36xf32>
    %c0_69 = arith.constant 0 : index
    %c0_70 = arith.constant 0 : index
    %47 = vector.load %arg6[%c0_69, %c0_70] : memref<36x256xf32, #tpu.memory_space<vmem>>, vector<36x256xf32>
    %cst_71 = arith.constant dense<0.000000e+00> : vector<8x256xf32>
    %48 = tpu.matmul %46, %47, %cst_71 {dimension_numbers = #tpu.dot_dimension_numbers<[1], [0], [0], [1], [0, 0, 1, 1], [], []>} : vector<8x36xf32>, vector<36x256xf32>, vector<8x256xf32> -> vector<8x256xf32>
    %c0_72 = arith.constant 0 : index
    %c0_73 = arith.constant 0 : index
    %c0_74 = arith.constant 0 : index
    %49 = vector.load %arg3[%c0_72, %c0_73, %c0_74] : memref<1x8x256xf32, #tpu.memory_space<vmem>>, vector<1x8x256xf32>
    %50 = vector.shape_cast %49 : vector<1x8x256xf32> to vector<8x256xf32>
    %51 = vector.shape_cast %48 : vector<8x256xf32> to vector<1x8x256xf32>
    tpu.vector_store %arg3[%c0_72, %c0_73, %c0_74], %51 {strides = array<i32>} : memref<1x8x256xf32, #tpu.memory_space<vmem>>, vector<1x8x256xf32>,
    %cst_75 = arith.constant dense<0.000000e+00> : vector<8xf32>
    %52 = vector.multi_reduction <add>, %48, %cst_75 [1] : vector<8x256xf32> to vector<8xf32>
    %53 = vector.shape_cast %52 : vector<8xf32> to vector<8x1xf32>
    %54 = arith.mulf %48, %48 : vector<8x256xf32>
    %cst_76 = arith.constant dense<0.000000e+00> : vector<8xf32>
    %55 = vector.multi_reduction <add>, %54, %cst_76 [1] : vector<8x256xf32> to vector<8xf32>
    %56 = vector.shape_cast %55 : vector<8xf32> to vector<8x1xf32>
    %57 = tpu.concatenate %53, %56 in 1 : vector<8x1xf32>, vector<8x1xf32> -> vector<8x2xf32>
    %c0_77 = arith.constant 0 : index
    %c0_78 = arith.constant 0 : index
    %c0_79 = arith.constant 0 : index
    %58 = vector.load %arg4[%c0_77, %c0_78, %c0_79] : memref<1x8x2xf32, #tpu.memory_space<vmem>>, vector<1x8x2xf32>
    %59 = vector.shape_cast %58 : vector<1x8x2xf32> to vector<8x2xf32>
    %60 = vector.shape_cast %57 : vector<8x2xf32> to vector<1x8x2xf32>
    tpu.vector_store %arg4[%c0_77, %c0_78, %c0_79], %60 {strides = array<i32>} : memref<1x8x2xf32, #tpu.memory_space<vmem>>, vector<1x8x2xf32>,
    return
  }
  func.func @transform_0(%arg0: i32) -> (i32, i32, i32, i32) {
    %c0_i32 = arith.constant 0 : i32
    %c0_i32_0 = arith.constant 0 : i32
    %c0_i32_1 = arith.constant 0 : i32
    %c0_i32_2 = arith.constant 0 : i32
    return %arg0, %c0_i32, %c0_i32_0, %c0_i32_1 : i32, i32, i32, i32
  }
  func.func @transform_1(%arg0: i32) -> (i32, i32) {
    %c0_i32 = arith.constant 0 : i32
    %c0_i32_0 = arith.constant 0 : i32
    %c0_i32_1 = arith.constant 0 : i32
    return %c0_i32, %c0_i32_0 : i32, i32
  }
  func.func @transform_2(%arg0: i32) -> (i32, i32, i32) {
    %c0_i32 = arith.constant 0 : i32
    %c0_i32_0 = arith.constant 0 : i32
    %c0_i32_1 = arith.constant 0 : i32
    return %arg0, %c0_i32, %c0_i32_0 : i32, i32, i32
  }
  func.func @transform_3(%arg0: i32) -> (i32, i32, i32) {
    %c0_i32 = arith.constant 0 : i32
    %c0_i32_0 = arith.constant 0 : i32
    %c0_i32_1 = arith.constant 0 : i32
    return %arg0, %c0_i32, %c0_i32_0 : i32, i32, i32
  }
}

module attributes {stable_mosaic.version = 11 : i64} {
  func.func @bn_apply_kernel(%arg0: i32, %arg1: memref<1x8x256xf32, #tpu.memory_space<vmem>>, %arg2: memref<8x1xf32, #tpu.memory_space<vmem>>, %arg3: memref<8x1xf32, #tpu.memory_space<vmem>>, %arg4: memref<1x8x256xf32, #tpu.memory_space<vmem>>) attributes {dimension_semantics = [#tpu.dimension_semantics<parallel>], iteration_bounds = array<i64: 2>, scalar_prefetch = 0 : i64, scratch_operands = 0 : i64, tpu.core_type = #tpu.core_type<tc>, window_params = [{transform_indices = @transform_0, window_bounds = array<i64: 1, 8, 256>}, {pipeline_mode = #tpu.pipeline_mode<synchronous>, transform_indices = @transform_1, window_bounds = array<i64: 8, 1>}, {pipeline_mode = #tpu.pipeline_mode<synchronous>, transform_indices = @transform_2, window_bounds = array<i64: 8, 1>}, {transform_indices = @transform_3, window_bounds = array<i64: 1, 8, 256>}]} {
    %c0 = arith.constant 0 : index
    %c0_0 = arith.constant 0 : index
    %c0_1 = arith.constant 0 : index
    %0 = vector.load %arg1[%c0, %c0_0, %c0_1] : memref<1x8x256xf32, #tpu.memory_space<vmem>>, vector<1x8x256xf32>
    %c0_2 = arith.constant 0 : index
    %c0_3 = arith.constant 0 : index
    %1 = vector.load %arg2[%c0_2, %c0_3] : memref<8x1xf32, #tpu.memory_space<vmem>>, vector<8x1xf32>
    %2 = vector.shape_cast %1 : vector<8x1xf32> to vector<1x8x1xf32>
    %3 = vector.broadcast %2 : vector<1x8x1xf32> to vector<1x8x256xf32>
    %4 = arith.mulf %0, %3 : vector<1x8x256xf32>
    %c0_4 = arith.constant 0 : index
    %c0_5 = arith.constant 0 : index
    %5 = vector.load %arg3[%c0_4, %c0_5] : memref<8x1xf32, #tpu.memory_space<vmem>>, vector<8x1xf32>
    %6 = vector.shape_cast %5 : vector<8x1xf32> to vector<1x8x1xf32>
    %7 = vector.broadcast %6 : vector<1x8x1xf32> to vector<1x8x256xf32>
    %8 = arith.addf %4, %7 : vector<1x8x256xf32>
    %c0_6 = arith.constant 0 : index
    %c0_7 = arith.constant 0 : index
    %c0_8 = arith.constant 0 : index
    %9 = vector.load %arg4[%c0_6, %c0_7, %c0_8] : memref<1x8x256xf32, #tpu.memory_space<vmem>>, vector<1x8x256xf32>
    tpu.vector_store %arg4[%c0_6, %c0_7, %c0_8], %8 {strides = array<i32>} : memref<1x8x256xf32, #tpu.memory_space<vmem>>, vector<1x8x256xf32>,
    return
  }
  func.func @transform_0(%arg0: i32) -> (i32, i32, i32) {
    %c0_i32 = arith.constant 0 : i32
    %c0_i32_0 = arith.constant 0 : i32
    %c0_i32_1 = arith.constant 0 : i32
    return %arg0, %c0_i32, %c0_i32_0 : i32, i32, i32
  }
  func.func @transform_1(%arg0: i32) -> (i32, i32) {
    %c0_i32 = arith.constant 0 : i32
    %c0_i32_0 = arith.constant 0 : i32
    %c0_i32_1 = arith.constant 0 : i32
    return %c0_i32, %c0_i32_0 : i32, i32
  }
  func.func @transform_2(%arg0: i32) -> (i32, i32) {
    %c0_i32 = arith.constant 0 : i32
    %c0_i32_0 = arith.constant 0 : i32
    %c0_i32_1 = arith.constant 0 : i32
    return %c0_i32, %c0_i32_0 : i32, i32
  }
  func.func @transform_3(%arg0: i32) -> (i32, i32, i32) {
    %c0_i32 = arith.constant 0 : i32
    %c0_i32_0 = arith.constant 0 : i32
    %c0_i32_1 = arith.constant 0 : i32
    return %arg0, %c0_i32, %c0_i32_0 : i32, i32, i32
  }
}

</mosaic_0001>

<llo_original>
// kernel: _dilconv_forward.3
$region0: #{_dilconv_forward.3}
  #allocation0 [shape = 'u32[]', space=smem, size = 0x4, offset = 0x4, fixed_abs, tag = 'smem constant byte address 0x4 - core index']
  #allocation1 [shape = 'u32[72,128]{1,0:T(1,128)}', space=vmem, size = 0x9000, scoped, tag = 'internal scratch']
  %s0 = inlined_call_operand.vmem [shape: f32[2,8,256], index: 0, kind: input, shape index: {}, may-alias: {0,3}]
  %s1 = inlined_call_operand.vmem [shape: f32[8,1], index: 1, kind: input, shape index: {}]
  %s2 = inlined_call_operand.vmem [shape: f32[8,1], index: 2, kind: input, shape index: {}]
  %s3 = inlined_call_operand.vmem [shape: f32[2,8,256], index: 3, kind: output, shape index: {}, may-alias: {0,3}]
  %s4 = sld [smem:[#allocation0]]
  $region45: #{_dilconv_forward.3} parent=0
    _
  %s6 = ssub.s32 1, %s4
  %s7 = scalar_select 0, %s6, %s4
  loop: start=0, step=1, limit=4
  $region2: #{_dilconv_forward.3} parent=0 // loop_pre_header
    _
  $region3: #{_dilconv_forward.3} parent=0 // loop_header
    %s9 = sphi 0, %s13
    %p10 = scmp.ge.s32.totalorder %s9, 4
    %s19 = sphi 0, %s21
    %s22 = sphi 0, %s19
    %s23 = sphi 0, %s22
    %s39 = sphi 0, %s23
    %s43 = sphi 0, %s43
    %s45 = sphi 0, %s43
    %s46 = sphi 0, %s45
    %s60 = sphi 0, %s46
    %s64 = sphi 0, %s64
    %s66 = sphi 0, %s64
    %s67 = sphi 0, %s66
    %s81 = sphi 0, %s67
    %s87 = sphi 0, %s89
    %s90 = sphi 0, %s87
    %s91 = sphi 0, %s90
    %s107 = sphi 0, %s91
  $region4: #{_dilconv_forward.3} parent=0 // loop_header_branch
    %12 = sbr.rel (%p10) target = $region8
  $region5: #{_dilconv_forward.3} parent=0 // loop_body
    %s14 = ssub.s32 %s9, 1
    %s15 = ssub.s32 %s9, 2
    %s16 = sadd.s32 %s9, 1
    %s17 = ssub.s32 %s9, %s16
    %p18 = scmp.eq.s32.totalorder %s17, 0
    %s20 = sadd.s32 %s19, 1
    %s21 = scalar_select %p18, %s19, %s20
    %p24 = pneg %p18
    %p25 = scmp.eq.s32.totalorder %s9, 1
    %p26 = por %p24, %p25
    %p27 = scmp.ne.s32.totalorder %s19, %s22
    %p28 = scmp.eq.s32.totalorder %s9, 0
    %p29 = por %p27, %p28
    %p30 = scmp.ne.s32.totalorder %s19, %s22
    %p31 = scmp.eq.s32.totalorder %s14, 1
    %p32 = por %p30, %p31
    %p33 = scmp.ne.s32.totalorder %s22, %s23
    %p34 = scmp.eq.s32.totalorder %s14, 0
    %p35 = por %p33, %p34
    %p36 = scmp.ne.s32.totalorder %s22, %s23
    %p37 = scmp.eq.s32.totalorder %s15, 1
    %p38 = por %p36, %p37
    %p40 = scmp.ne.s32.totalorder %s23, %s39
    %p41 = scmp.eq.s32.totalorder %s15, 0
    %p42 = por %p40, %p41
    %s44 = sadd.s32 %s43, 1
    %p47 = scmp.eq.s32.totalorder %s9, 1
    %p48 = scmp.ne.s32.totalorder %s43, %s45
    %p49 = scmp.eq.s32.totalorder %s9, 0
    %p50 = por %p48, %p49
    %p51 = scmp.ne.s32.totalorder %s43, %s45
    %p52 = scmp.eq.s32.totalorder %s14, 1
    %p53 = por %p51, %p52
    %p54 = scmp.ne.s32.totalorder %s45, %s46
    %p55 = scmp.eq.s32.totalorder %s14, 0
    %p56 = por %p54, %p55
    %p57 = scmp.ne.s32.totalorder %s45, %s46
    %p58 = scmp.eq.s32.totalorder %s15, 1
    %p59 = por %p57, %p58
    %p61 = scmp.ne.s32.totalorder %s46, %s60
    %p62 = scmp.eq.s32.totalorder %s15, 0
    %p63 = por %p61, %p62
    %s65 = sadd.s32 %s64, 1
    %p68 = scmp.eq.s32.totalorder %s9, 1
    %p69 = scmp.ne.s32.totalorder %s64, %s66
    %p70 = scmp.eq.s32.totalorder %s9, 0
    %p71 = por %p69, %p70
    %p72 = scmp.ne.s32.totalorder %s64, %s66
    %p73 = scmp.eq.s32.totalorder %s14, 1
    %p74 = por %p72, %p73
    %p75 = scmp.ne.s32.totalorder %s66, %s67
    %p76 = scmp.eq.s32.totalorder %s14, 0
    %p77 = por %p75, %p76
    %p78 = scmp.ne.s32.totalorder %s66, %s67
    %p79 = scmp.eq.s32.totalorder %s15, 1
    %p80 = por %p78, %p79
    %p82 = scmp.ne.s32.totalorder %s67, %s81
    %p83 = scmp.eq.s32.totalorder %s15, 0
    %p84 = por %p82, %p83
    %s85 = ssub.s32 %s9, %s16
    %p86 = scmp.eq.s32.totalorder %s85, 0
    %s88 = sadd.s32 %s87, 1
    %s89 = scalar_select %p86, %s87, %s88
    %p92 = pneg %p86
    %p93 = scmp.eq.s32.totalorder %s9, 1
    %p94 = por %p92, %p93
    %p95 = scmp.ne.s32.totalorder %s87, %s90
    %p96 = scmp.eq.s32.totalorder %s9, 0
    %p97 = por %p95, %p96
    %p98 = scmp.ne.s32.totalorder %s87, %s90
    %p99 = scmp.eq.s32.totalorder %s14, 1
    %p100 = por %p98, %p99
    %p101 = scmp.ne.s32.totalorder %s90, %s91
    %p102 = scmp.eq.s32.totalorder %s14, 0
    %p103 = por %p101, %p102
    %p104 = scmp.ne.s32.totalorder %s90, %s91
    %p105 = scmp.eq.s32.totalorder %s15, 1
    %p106 = por %p104, %p105
    %p108 = scmp.ne.s32.totalorder %s91, %s107
    %p109 = scmp.eq.s32.totalorder %s15, 0
    %p110 = por %p108, %p109
    %p111 = scmp.le.s32.totalorder 1, %s9
    %p112 = scmp.lt.s32.totalorder %s9, 3
    %p113 = pnand %p111, %p112
    %p114 = pneg %p113
    // Predicated region
    $region9: #{_dilconv_forward.3} parent=5 // pred_check
      _
    $region10: #{_dilconv_forward.3} parent=5 // pred_check_branch
      %116 = sbr.rel (%p113) target = $region12
    $region11: #{_dilconv_forward.3} parent=5 // pred_region
      %s117 = ssub.s32 %s9, 1
      // Predicated region
      $region13: #{_dilconv_forward.3} parent=11 // pred_check
        %p118 = pneg %p56
      $region14: #{_dilconv_forward.3} parent=11 // pred_check_branch
        %120 = sbr.rel (%p118) target = $region16
      $region15: #{_dilconv_forward.3} parent=11 // pred_region
        _
      $region16: #{_dilconv_forward.3} parent=11 // pred_fallthru
        _
      // Predicated region
      $region17: #{_dilconv_forward.3} parent=11 // pred_check
        %p121 = pneg %p77
      $region18: #{_dilconv_forward.3} parent=11 // pred_check_branch
        %123 = sbr.rel (%p121) target = $region20
      $region19: #{_dilconv_forward.3} parent=11 // pred_region
        _
      $region20: #{_dilconv_forward.3} parent=11 // pred_fallthru
        _
    $region12: #{_dilconv_forward.3} parent=5 // pred_fallthru
      _
    %p124 = scmp.lt.s32.totalorder %s9, 2
    // Predicated region
    $region21: #{_dilconv_forward.3} parent=5 // pred_check
      %p125 = pneg %p124
    $region22: #{_dilconv_forward.3} parent=5 // pred_check_branch
      %127 = sbr.rel (%p125) target = $region24
    $region23: #{_dilconv_forward.3} parent=5 // pred_region
      // Predicated region
      $region25: #{_dilconv_forward.3} parent=23 // pred_check
        %p128 = pneg %p29
      $region26: #{_dilconv_forward.3} parent=23 // pred_check_branch
        %130 = sbr.rel (%p128) target = $region28
      $region27: #{_dilconv_forward.3} parent=23 // pred_region
        %p131 = scmp.lt.s32.totalorder %s9, 1
        %s132 = scalar_select %p131, %s9, 1
        %s133 = smul.addr %s132, 2
        %s134 = smul.addr %s133, 8
        %s135 = scalar_lea.vmem %s0, %s134
      $region28: #{_dilconv_forward.3} parent=23 // pred_fallthru
        _
    $region24: #{_dilconv_forward.3} parent=5 // pred_fallthru
      _
    %p136 = scmp.le.s32.totalorder 1, %s9
    %p137 = scmp.lt.s32.totalorder %s9, 3
    %p138 = pnand %p136, %p137
    %p139 = pneg %p138
    // Predicated region
    $region29: #{_dilconv_forward.3} parent=5 // pred_check
      _
    $region30: #{_dilconv_forward.3} parent=5 // pred_check_branch
      %141 = sbr.rel (%p138) target = $region32
    $region31: #{_dilconv_forward.3} parent=5 // pred_region
      %s142 = ssub.s32 %s9, 1
      %p143 = scmp.lt.s32.totalorder %s14, 1
      %s144 = scalar_select %p143, %s14, 1
      %s145 = smul.addr %s144, 2
      %s146 = smul.addr %s145, 8
      %s147 = scalar_lea.vmem %s0, %s146
      %p148 = pneg %p35
      %p149 = pneg %p32
      %p150 = pneg %p56
      %p151 = pneg %p53
      %p152 = pneg %p77
      %p153 = pneg %p74
      %p154 = pneg %p103
      %p155 = pneg %p100
      %p156 = scmp.lt.s32.totalorder %s14, 1
      %s157 = scalar_select %p156, %s14, 1
      %s158 = smul.addr %s157, 2
      %s159 = smul.addr %s158, 8
      %s160 = scalar_lea.vmem %s3, %s159
      %p161 = scmp.lt.s32.totalorder %s14, 1
      %s162 = scalar_select %p161, %s14, 1
      %s163 = smul.addr %s162, 2
      %s164 = smul.addr %s163, 8
      %s165 = scalar_lea.vmem %s0, %s164
      %p166 = scmp.lt.s32.totalorder %s14, 1
      %s167 = scalar_select %p166, %s14, 1
      %s168 = smul.addr %s167, 2
      %s169 = smul.addr %s168, 8
      %s170 = scalar_lea.vmem %s3, %s169
      %v171 = vld [vmem:[%s165] sm:$0xff]
      %v172 = vld [vmem:[%s165 + $0x8] sm:$0xff]
      %v173 = vld [vmem:[%s1] sm:$0xff]
      %175 = vset.pattern.permute.xlu0 0
      %176 = vperm.xlu0 %175, %v173
      %v177 = vpop.permute.xlu0 %176
      %v179 = vmul.f32 %v171, %v177
      %v180 = vmul.f32 %v172, %v177
      %v181 = vld [vmem:[%s2] sm:$0xff]
      %183 = vset.pattern.permute.xlu0 0
      %184 = vperm.xlu0 %183, %v181
      %v185 = vpop.permute.xlu0 %184
      %v187 = vadd.f32 %v179, %v185
      %v188 = vadd.f32 %v180, %v185
      %189 = vst [vmem:[%s170] sm:$0xff] %v187
      %190 = vst [vmem:[%s170 + $0x8] sm:$0xff] %v188
      %p191 = scmp.lt.s32.totalorder %s14, 1
      %s192 = scalar_select %p191, %s14, 1
      %s193 = smul.addr %s192, 2
      %s194 = smul.addr %s193, 8
      %s195 = scalar_lea.vmem %s3, %s194
      // Predicated region
      $region33: #{_dilconv_forward.3} parent=31 // pred_check
        %p196 = pneg %p100
      $region34: #{_dilconv_forward.3} parent=31 // pred_check_branch
        %198 = sbr.rel (%p196) target = $region36
      $region35: #{_dilconv_forward.3} parent=31 // pred_region
        _
      $region36: #{_dilconv_forward.3} parent=31 // pred_fallthru
        _
    $region32: #{_dilconv_forward.3} parent=5 // pred_fallthru
      _
    %p199 = scmp.le.s32.totalorder 2, %s9
    // Predicated region
    $region37: #{_dilconv_forward.3} parent=5 // pred_check
      %p200 = pneg %p199
    $region38: #{_dilconv_forward.3} parent=5 // pred_check_branch
      %202 = sbr.rel (%p200) target = $region40
    $region39: #{_dilconv_forward.3} parent=5 // pred_region
      %s203 = ssub.s32 %s9, 2
      // Predicated region
      $region41: #{_dilconv_forward.3} parent=39 // pred_check
        %p204 = pneg %p106
      $region42: #{_dilconv_forward.3} parent=39 // pred_check_branch
        %206 = sbr.rel (%p204) target = $region44
      $region43: #{_dilconv_forward.3} parent=39 // pred_region
        %p207 = scmp.lt.s32.totalorder %s15, 1
        %s208 = scalar_select %p207, %s15, 1
        %s209 = smul.addr %s208, 2
        %s210 = smul.addr %s209, 8
        %s211 = scalar_lea.vmem %s3, %s210
      $region44: #{_dilconv_forward.3} parent=39 // pred_fallthru
        _
    $region40: #{_dilconv_forward.3} parent=5 // pred_fallthru
      _
  $region6: #{_dilconv_forward.3} parent=0 // loop_footer
    %s13 = sadd.s32 1, %s9
  $region7: #{_dilconv_forward.3} parent=0 // loop_footer_branch
    %8 = sbr.rel target = $region3
  $region8: #{_dilconv_forward.3} parent=0 // loop_exit
    _

// kernel: _dilconv_forward.2
$region0: #{_dilconv_forward.2}
  #allocation0 [shape = 'u32[]', space=smem, size = 0x4, offset = 0x4, fixed_abs, tag = 'smem constant byte address 0x4 - core index']
  #allocation1 [shape = 'u32[72,128]{1,0:T(1,128)}', space=vmem, size = 0x9000, scoped, tag = 'internal scratch']
  #allocation2 [shape = 'f32[1,4,26,20]{3,2,1,0:T(8,128)}', space=vmem, size = 0x10000, scoped, tag = 'scratch operand']
  #allocation3 [shape = 'f32[36,256]{1,0:T(8,128)}', space=vmem, size = 0xa000, scoped, tag = 'scratch operand']
  %s0 = inlined_call_operand.vmem [shape: f32[2,4,16,16], index: 0, kind: input, shape index: {}]
  %s1 = inlined_call_operand.vmem [shape: f32[8,36], index: 1, kind: input, shape index: {}]
  %s2 = inlined_call_operand.vmem [shape: f32[2,8,256], index: 2, kind: output, shape index: {0}]
  %s3 = inlined_call_operand.vmem [shape: f32[2,8,2], index: 3, kind: output, shape index: {1}]
  %4 = xla_tuple %s2, %s3
  %s5 = sld [smem:[#allocation0]]
  $region49: #{_dilconv_forward.2} parent=0
    _
  %s7 = ssub.s32 1, %s5
  %s8 = scalar_select 0, %s7, %s5
  loop: start=0, step=1, limit=4
  $region2: #{_dilconv_forward.2} parent=0 // loop_pre_header
    _
  $region3: #{_dilconv_forward.2} parent=0 // loop_header
    %s10 = sphi 0, %s14
    %p11 = scmp.ge.s32.totalorder %s10, 4
    %s20 = sphi 0, %s22
    %s23 = sphi 0, %s20
    %s24 = sphi 0, %s23
    %s40 = sphi 0, %s24
    %s44 = sphi 0, %s44
    %s46 = sphi 0, %s44
    %s47 = sphi 0, %s46
    %s61 = sphi 0, %s47
    %s67 = sphi 0, %s69
    %s70 = sphi 0, %s67
    %s71 = sphi 0, %s70
    %s87 = sphi 0, %s71
    %s93 = sphi 0, %s95
    %s96 = sphi 0, %s93
    %s97 = sphi 0, %s96
    %s113 = sphi 0, %s97
  $region4: #{_dilconv_forward.2} parent=0 // loop_header_branch
    %13 = sbr.rel (%p11) target = $region8
  $region5: #{_dilconv_forward.2} parent=0 // loop_body
    %s15 = ssub.s32 %s10, 1
    %s16 = ssub.s32 %s10, 2
    %s17 = sadd.s32 %s10, 1
    %s18 = ssub.s32 %s10, %s17
    %p19 = scmp.eq.s32.totalorder %s18, 0
    %s21 = sadd.s32 %s20, 1
    %s22 = scalar_select %p19, %s20, %s21
    %p25 = pneg %p19
    %p26 = scmp.eq.s32.totalorder %s10, 1
    %p27 = por %p25, %p26
    %p28 = scmp.ne.s32.totalorder %s20, %s23
    %p29 = scmp.eq.s32.totalorder %s10, 0
    %p30 = por %p28, %p29
    %p31 = scmp.ne.s32.totalorder %s20, %s23
    %p32 = scmp.eq.s32.totalorder %s15, 1
    %p33 = por %p31, %p32
    %p34 = scmp.ne.s32.totalorder %s23, %s24
    %p35 = scmp.eq.s32.totalorder %s15, 0
    %p36 = por %p34, %p35
    %p37 = scmp.ne.s32.totalorder %s23, %s24
    %p38 = scmp.eq.s32.totalorder %s16, 1
    %p39 = por %p37, %p38
    %p41 = scmp.ne.s32.totalorder %s24, %s40
    %p42 = scmp.eq.s32.totalorder %s16, 0
    %p43 = por %p41, %p42
    %s45 = sadd.s32 %s44, 1
    %p48 = scmp.eq.s32.totalorder %s10, 1
    %p49 = scmp.ne.s32.totalorder %s44, %s46
    %p50 = scmp.eq.s32.totalorder %s10, 0
    %p51 = por %p49, %p50
    %p52 = scmp.ne.s32.totalorder %s44, %s46
    %p53 = scmp.eq.s32.totalorder %s15, 1
    %p54 = por %p52, %p53
    %p55 = scmp.ne.s32.totalorder %s46, %s47
    %p56 = scmp.eq.s32.totalorder %s15, 0
    %p57 = por %p55, %p56
    %p58 = scmp.ne.s32.totalorder %s46, %s47
    %p59 = scmp.eq.s32.totalorder %s16, 1
    %p60 = por %p58, %p59
    %p62 = scmp.ne.s32.totalorder %s47, %s61
    %p63 = scmp.eq.s32.totalorder %s16, 0
    %p64 = por %p62, %p63
    %s65 = ssub.s32 %s10, %s17
    %p66 = scmp.eq.s32.totalorder %s65, 0
    %s68 = sadd.s32 %s67, 1
    %s69 = scalar_select %p66, %s67, %s68
    %p72 = pneg %p66
    %p73 = scmp.eq.s32.totalorder %s10, 1
    %p74 = por %p72, %p73
    %p75 = scmp.ne.s32.totalorder %s67, %s70
    %p76 = scmp.eq.s32.totalorder %s10, 0
    %p77 = por %p75, %p76
    %p78 = scmp.ne.s32.totalorder %s67, %s70
    %p79 = scmp.eq.s32.totalorder %s15, 1
    %p80 = por %p78, %p79
    %p81 = scmp.ne.s32.totalorder %s70, %s71
    %p82 = scmp.eq.s32.totalorder %s15, 0
    %p83 = por %p81, %p82
    %p84 = scmp.ne.s32.totalorder %s70, %s71
    %p85 = scmp.eq.s32.totalorder %s16, 1
    %p86 = por %p84, %p85
    %p88 = scmp.ne.s32.totalorder %s71, %s87
    %p89 = scmp.eq.s32.totalorder %s16, 0
    %p90 = por %p88, %p89
    %s91 = ssub.s32 %s10, %s17
    %p92 = scmp.eq.s32.totalorder %s91, 0
    %s94 = sadd.s32 %s93, 1
    %s95 = scalar_select %p92, %s93, %s94
    %p98 = pneg %p92
    %p99 = scmp.eq.s32.totalorder %s10, 1
    %p100 = por %p98, %p99
    %p101 = scmp.ne.s32.totalorder %s93, %s96
    %p102 = scmp.eq.s32.totalorder %s10, 0
    %p103 = por %p101, %p102
    %p104 = scmp.ne.s32.totalorder %s93, %s96
    %p105 = scmp.eq.s32.totalorder %s15, 1
    %p106 = por %p104, %p105
    %p107 = scmp.ne.s32.totalorder %s96, %s97
    %p108 = scmp.eq.s32.totalorder %s15, 0
    %p109 = por %p107, %p108
    %p110 = scmp.ne.s32.totalorder %s96, %s97
    %p111 = scmp.eq.s32.totalorder %s16, 1
    %p112 = por %p110, %p111
    %p114 = scmp.ne.s32.totalorder %s97, %s113
    %p115 = scmp.eq.s32.totalorder %s16, 0
    %p116 = por %p114, %p115
    %p117 = scmp.le.s32.totalorder 1, %s10
    %p118 = scmp.lt.s32.totalorder %s10, 3
    %p119 = pnand %p117, %p118
    %p120 = pneg %p119
    // Predicated region
    $region9: #{_dilconv_forward.2} parent=5 // pred_check
      _
    $region10: #{_dilconv_forward.2} parent=5 // pred_check_branch
      %122 = sbr.rel (%p119) target = $region12
    $region11: #{_dilconv_forward.2} parent=5 // pred_region
      %s123 = ssub.s32 %s10, 1
      // Predicated region
      $region13: #{_dilconv_forward.2} parent=11 // pred_check
        %p124 = pneg %p57
      $region14: #{_dilconv_forward.2} parent=11 // pred_check_branch
        %126 = sbr.rel (%p124) target = $region16
      $region15: #{_dilconv_forward.2} parent=11 // pred_region
        _
      $region16: #{_dilconv_forward.2} parent=11 // pred_fallthru
        _
    $region12: #{_dilconv_forward.2} parent=5 // pred_fallthru
      _
    %p127 = scmp.lt.s32.totalorder %s10, 2
    // Predicated region
    $region17: #{_dilconv_forward.2} parent=5 // pred_check
      %p128 = pneg %p127
    $region18: #{_dilconv_forward.2} parent=5 // pred_check_branch
      %130 = sbr.rel (%p128) target = $region20
    $region19: #{_dilconv_forward.2} parent=5 // pred_region
      // Predicated region
      $region21: #{_dilconv_forward.2} parent=19 // pred_check
        %p131 = pneg %p30
      $region22: #{_dilconv_forward.2} parent=19 // pred_check_branch
        %133 = sbr.rel (%p131) target = $region24
      $region23: #{_dilconv_forward.2} parent=19 // pred_region
        %p134 = scmp.lt.s32.totalorder %s10, 1
        %s135 = scalar_select %p134, %s10, 1
        %s136 = smul.addr %s135, 8
        %s137 = smul.addr %s136, 8
        %s138 = scalar_lea.vmem %s0, %s137
      $region24: #{_dilconv_forward.2} parent=19 // pred_fallthru
        _
    $region20: #{_dilconv_forward.2} parent=5 // pred_fallthru
      _
    %p139 = scmp.le.s32.totalorder 1, %s10
    %p140 = scmp.lt.s32.totalorder %s10, 3
    %p141 = pnand %p139, %p140
    %p142 = pneg %p141
    // Predicated region
    $region25: #{_dilconv_forward.2} parent=5 // pred_check
      _
    $region26: #{_dilconv_forward.2} parent=5 // pred_check_branch
      %144 = sbr.rel (%p141) target = $region28
    $region27: #{_dilconv_forward.2} parent=5 // pred_region
      %s145 = ssub.s32 %s10, 1
      %p146 = scmp.lt.s32.totalorder %s15, 1
      %s147 = scalar_select %p146, %s15, 1
      %s148 = smul.addr %s147, 8
      %s149 = smul.addr %s148, 8
      %s150 = scalar_lea.vmem %s0, %s149
      %p151 = pneg %p36
      %p152 = pneg %p33
      %p153 = pneg %p57
      %p154 = pneg %p54
      %p155 = pneg %p83
      %p156 = pneg %p80
      %p157 = scmp.lt.s32.totalorder %s15, 1
      %s158 = scalar_select %p157, %s15, 1
      %s159 = smul.addr %s158, 2
      %s160 = smul.addr %s159, 8
      %s161 = scalar_lea.vmem %s2, %s160
      %p162 = pneg %p109
      %p163 = pneg %p106
      %p164 = scmp.lt.s32.totalorder %s15, 1
      %s165 = scalar_select %p164, %s15, 1
      %s166 = smul.addr %s165, 8
      %s167 = scalar_lea.vmem %s3, %s166
      %p168 = scmp.lt.s32.totalorder %s15, 1
      %s169 = scalar_select %p168, %s15, 1
      %s170 = smul.addr %s169, 8
      %s171 = smul.addr %s170, 8
      %s172 = scalar_lea.vmem %s0, %s171
      %p173 = scmp.lt.s32.totalorder %s15, 1
      %s174 = scalar_select %p173, %s15, 1
      %s175 = smul.addr %s174, 2
      %s176 = smul.addr %s175, 8
      %s177 = scalar_lea.vmem %s2, %s176
      %p178 = scmp.lt.s32.totalorder %s15, 1
      %s179 = scalar_select %p178, %s15, 1
      %s180 = smul.addr %s179, 8
      %s181 = scalar_lea.vmem %s3, %s180
      %vm182 = vcmask 156672
      %183 = vst.msk [vmem:[#allocation2 + $0x6] sm:$0x3] %vm182, 0.0
      %184 = vst.msk [vmem:[#allocation2 + $0x26] sm:$0x3] %vm182, 0.0
      %185 = vst.msk [vmem:[#allocation2 + $0x46] sm:$0x3] %vm182, 0.0
      %186 = vst.msk [vmem:[#allocation2 + $0x66] sm:$0x3] %vm182, 0.0
      %187 = vst.msk [vmem:[#allocation2 + $0x18] sm:$0x3] %vm182, 0.0
      %188 = vst.msk [vmem:[#allocation2 + $0x38] sm:$0x3] %vm182, 0.0
      %189 = vst.msk [vmem:[#allocation2 + $0x58] sm:$0x3] %vm182, 0.0
      %190 = vst.msk [vmem:[#allocation2 + $0x78] sm:$0x3] %vm182, 0.0
      %vm191 = vcmask 15360
      %192 = vst.msk [vmem:[#allocation2] sm:$0xff] %vm191, 0.0
      %193 = vst.msk [vmem:[#allocation2 + $0x8] sm:$0xff] %vm191, 0.0
      %194 = vst.msk [vmem:[#allocation2 + $0x10] sm:$0xff] %vm191, 0.0
      %vm195 = vcmask 9216
      %196 = vst.msk [vmem:[#allocation2 + $0x18] sm:$0x3] %vm195, 0.0
      %197 = vst.msk [vmem:[#allocation2 + $0x20] sm:$0xff] %vm191, 0.0
      %198 = vst.msk [vmem:[#allocation2 + $0x28] sm:$0xff] %vm191, 0.0
      %199 = vst.msk [vmem:[#allocation2 + $0x30] sm:$0xff] %vm191, 0.0
      %200 = vst.msk [vmem:[#allocation2 + $0x38] sm:$0x3] %vm195, 0.0
      %201 = vst.msk [vmem:[#allocation2 + $0x40] sm:$0xff] %vm191, 0.0
      %202 = vst.msk [vmem:[#allocation2 + $0x48] sm:$0xff] %vm191, 0.0
      %203 = vst.msk [vmem:[#allocation2 + $0x50] sm:$0xff] %vm191, 0.0
      %204 = vst.msk [vmem:[#allocation2 + $0x58] sm:$0x3] %vm195, 0.0
      %205 = vst.msk [vmem:[#allocation2 + $0x60] sm:$0xff] %vm191, 0.0
      %206 = vst.msk [vmem:[#allocation2 + $0x68] sm:$0xff] %vm191, 0.0
      %207 = vst.msk [vmem:[#allocation2 + $0x70] sm:$0xff] %vm191, 0.0
      %208 = vst.msk [vmem:[#allocation2 + $0x78] sm:$0x3] %vm195, 0.0
      %vm209 = vcmask 162960
      %210 = vst.msk [vmem:[#allocation2] sm:$0xff] %vm209, 0.0
      %211 = vst.msk [vmem:[#allocation2 + $0x8] sm:$0xff] %vm209, 0.0
      %212 = vst.msk [vmem:[#allocation2 + $0x10] sm:$0xff] %vm209, 0.0
      %vm213 = vcmask 156816
      %214 = vst.msk [vmem:[#allocation2 + $0x18] sm:$0x3] %vm213, 0.0
      %215 = vst.msk [vmem:[#allocation2 + $0x20] sm:$0xff] %vm209, 0.0
      %216 = vst.msk [vmem:[#allocation2 + $0x28] sm:$0xff] %vm209, 0.0
      %217 = vst.msk [vmem:[#allocation2 + $0x30] sm:$0xff] %vm209, 0.0
      %218 = vst.msk [vmem:[#allocation2 + $0x38] sm:$0x3] %vm213, 0.0
      %219 = vst.msk [vmem:[#allocation2 + $0x40] sm:$0xff] %vm209, 0.0
      %220 = vst.msk [vmem:[#allocation2 + $0x48] sm:$0xff] %vm209, 0.0
      %221 = vst.msk [vmem:[#allocation2 + $0x50] sm:$0xff] %vm209, 0.0
      %222 = vst.msk [vmem:[#allocation2 + $0x58] sm:$0x3] %vm213, 0.0
      %223 = vst.msk [vmem:[#allocation2 + $0x60] sm:$0xff] %vm209, 0.0
      %224 = vst.msk [vmem:[#allocation2 + $0x68] sm:$0xff] %vm209, 0.0
      %225 = vst.msk [vmem:[#allocation2 + $0x70] sm:$0xff] %vm209, 0.0
      %226 = vst.msk [vmem:[#allocation2 + $0x78] sm:$0x3] %vm213, 0.0
      %v227 = vld [vmem:[%s172] sm:$0xff]
      %v228 = vld [vmem:[%s172 + $0x8] sm:$0xff]
      %v229 = vld [vmem:[%s172 + $0x10] sm:$0xff]
      %v230 = vld [vmem:[%s172 + $0x18] sm:$0xff]
      %v231 = vld [vmem:[%s172 + $0x20] sm:$0xff]
      %v232 = vld [vmem:[%s172 + $0x28] sm:$0xff]
      %v233 = vld [vmem:[%s172 + $0x30] sm:$0xff]
      %v234 = vld [vmem:[%s172 + $0x38] sm:$0xff]
      %v235 = vmax.f32 %v227, 0.0
      %v236 = vmax.f32 %v228, 0.0
      %v237 = vmax.f32 %v229, 0.0
      %v238 = vmax.f32 %v230, 0.0
      %v239 = vmax.f32 %v231, 0.0
      %v240 = vmax.f32 %v232, 0.0
      %v241 = vmax.f32 %v233, 0.0
      %v242 = vmax.f32 %v234, 0.0
      %251 = vrot.lane.b32.xlu0 %v235, 2
      %v252 = vpop.permute.xlu0 %251
      %253 = vrot.lane.b32.xlu0 %v236, 2
      %v254 = vpop.permute.xlu0 %253
      %255 = vrot.lane.b32.xlu0 %v237, 2
      %v256 = vpop.permute.xlu0 %255
      %257 = vrot.lane.b32.xlu0 %v238, 2
      %v258 = vpop.permute.xlu0 %257
      %259 = vrot.lane.b32.xlu0 %v239, 2
      %v260 = vpop.permute.xlu0 %259
      %261 = vrot.lane.b32.xlu0 %v240, 2
      %v262 = vpop.permute.xlu0 %261
      %263 = vrot.lane.b32.xlu0 %v241, 2
      %v264 = vpop.permute.xlu0 %263
      %265 = vrot.lane.b32.xlu0 %v242, 2
      %v266 = vpop.permute.xlu0 %265
      %vm275 = vcmask 146448
      %276 = vst.msk [vmem:[#allocation2 + $0x8] sm:$0xff] %vm275, %v252
      %277 = vst.msk [vmem:[#allocation2 + $0x10] sm:$0xff] %vm275, %v254
      %278 = vst.msk [vmem:[#allocation2 + $0x28] sm:$0xff] %vm275, %v256
      %279 = vst.msk [vmem:[#allocation2 + $0x30] sm:$0xff] %vm275, %v258
      %280 = vst.msk [vmem:[#allocation2 + $0x48] sm:$0xff] %vm275, %v260
      %281 = vst.msk [vmem:[#allocation2 + $0x50] sm:$0xff] %vm275, %v262
      %282 = vst.msk [vmem:[#allocation2 + $0x68] sm:$0xff] %vm275, %v264
      %283 = vst.msk [vmem:[#allocation2 + $0x70] sm:$0xff] %vm275, %v266
      %v284 = vld [vmem:[#allocation2 + $0x6] sm:$0xff]
      %v285 = vld [vmem:[#allocation2 + $0xe] sm:$0xff]
      %v286 = vld [vmem:[#allocation2 + $0x26] sm:$0xff]
      %v287 = vld [vmem:[#allocation2 + $0x2e] sm:$0xff]
      %v288 = vld [vmem:[#allocation2 + $0x46] sm:$0xff]
      %v289 = vld [vmem:[#allocation2 + $0x4e] sm:$0xff]
      %v290 = vld [vmem:[#allocation2 + $0x66] sm:$0xff]
      %v291 = vld [vmem:[#allocation2 + $0x6e] sm:$0xff]
      %v292 = vrot.slane %v288, 4
      %vm293 = vcmask 1047556
      %v294 = vsel %vm293, %v292, %v284
      %v295 = vrot.slane %v284, 4
      %v296 = vsel %vm293, %v288, %v295
      %v298 = vunpack.c.l.s4 1983009808
      %v299 = vunpack.c.0.s8 %v298
      %v300 = vperm.slane %v294, %v299
      %v302 = vunpack.c.l.s4 1983009808
      %v303 = vunpack.c.0.s8 %v302
      %v304 = vperm.slane %v296, %v303
      %v305 = vrot.slane %v290, 4
      %v306 = vsel %vm293, %v305, %v286
      %v307 = vrot.slane %v286, 4
      %v308 = vsel %vm293, %v290, %v307
      %v310 = vunpack.c.l.s4 1983009808
      %v311 = vunpack.c.0.s8 %v310
      %v312 = vperm.slane %v306, %v311
      %v314 = vunpack.c.l.s4 1983009808
      %v315 = vunpack.c.0.s8 %v314
      %v316 = vperm.slane %v308, %v315
      %v317 = vrot.slane %v312, 4
      %v318 = vsel %vm293, %v317, %v300
      %v319 = vrot.slane %v300, 4
      %v320 = vsel %vm293, %v312, %v319
      %v322 = vunpack.c.l.s4 1934713408
      %v323 = vunpack.c.0.s8 %v322
      %v324 = vperm.slane %v318, %v323
      %v326 = vunpack.c.l.s4 1934713408
      %v327 = vunpack.c.0.s8 %v326
      %v328 = vperm.slane %v320, %v327
      %v329 = vrot.slane %v316, 4
      %v330 = vsel %vm293, %v329, %v304
      %v331 = vrot.slane %v304, 4
      %v332 = vsel %vm293, %v316, %v331
      %v334 = vunpack.c.l.s4 1934713408
      %v335 = vunpack.c.0.s8 %v334
      %v336 = vperm.slane %v330, %v335
      %v338 = vunpack.c.l.s4 1934713408
      %v339 = vunpack.c.0.s8 %v338
      %v340 = vperm.slane %v332, %v339
      %v341 = vrot.slane %v324, 4
      %v342 = vsel %vm293, 0.0, %v341
      %v343 = vrot.slane %v328, 4
      %v344 = vsel %vm293, 0.0, %v343
      %v345 = vrot.slane %v336, 4
      %v346 = vsel %vm293, 0.0, %v345
      %v347 = vrot.slane %v340, 4
      %v348 = vsel %vm293, 0.0, %v347
      %v349 = vrot.slane %v289, 4
      %v350 = vsel %vm293, %v349, %v285
      %v351 = vrot.slane %v285, 4
      %v352 = vsel %vm293, %v289, %v351
      %v354 = vunpack.c.l.s4 1983009808
      %v355 = vunpack.c.0.s8 %v354
      %v356 = vperm.slane %v350, %v355
      %v358 = vunpack.c.l.s4 1983009808
      %v359 = vunpack.c.0.s8 %v358
      %v360 = vperm.slane %v352, %v359
      %v361 = vrot.slane %v291, 4
      %v362 = vsel %vm293, %v361, %v287
      %v363 = vrot.slane %v287, 4
      %v364 = vsel %vm293, %v291, %v363
      %v366 = vunpack.c.l.s4 1983009808
      %v367 = vunpack.c.0.s8 %v366
      %v368 = vperm.slane %v362, %v367
      %v370 = vunpack.c.l.s4 1983009808
      %v371 = vunpack.c.0.s8 %v370
      %v372 = vperm.slane %v364, %v371
      %v373 = vrot.slane %v368, 4
      %v374 = vsel %vm293, %v373, %v356
      %v375 = vrot.slane %v356, 4
      %v376 = vsel %vm293, %v368, %v375
      %v378 = vunpack.c.l.s4 1934713408
      %v379 = vunpack.c.0.s8 %v378
      %v380 = vperm.slane %v374, %v379
      %v382 = vunpack.c.l.s4 1934713408
      %v383 = vunpack.c.0.s8 %v382
      %v384 = vperm.slane %v376, %v383
      %v385 = vrot.slane %v372, 4
      %v386 = vsel %vm293, %v385, %v360
      %v387 = vrot.slane %v360, 4
      %v388 = vsel %vm293, %v372, %v387
      %v390 = vunpack.c.l.s4 1934713408
      %v391 = vunpack.c.0.s8 %v390
      %v392 = vperm.slane %v386, %v391
      %v394 = vunpack.c.l.s4 1934713408
      %v395 = vunpack.c.0.s8 %v394
      %v396 = vperm.slane %v388, %v395
      %v397 = vrot.slane %v380, 4
      %v398 = vsel %vm293, 0.0, %v397
      %v399 = vrot.slane %v384, 4
      %v400 = vsel %vm293, 0.0, %v399
      %v401 = vrot.slane %v392, 4
      %v402 = vsel %vm293, 0.0, %v401
      %v403 = vrot.slane %v396, 4
      %v404 = vsel %vm293, 0.0, %v403
      %406 = vrot.lane.b32.xlu0 %v342, 16
      %v407 = vpop.permute.xlu0 %406
      %410 = vrot.lane.b32.xlu0 %v328, 32
      %v411 = vpop.permute.xlu0 %410
      %414 = vrot.lane.b32.xlu0 %v344, 48
      %v415 = vpop.permute.xlu0 %414
      %418 = vrot.lane.b32.xlu0 %v336, 64
      %v419 = vpop.permute.xlu0 %418
      %422 = vrot.lane.b32.xlu0 %v346, 80
      %v423 = vpop.permute.xlu0 %422
      %426 = vrot.lane.b32.xlu0 %v340, 96
      %v427 = vpop.permute.xlu0 %426
      %430 = vrot.lane.b32.xlu0 %v348, 112
      %v431 = vpop.permute.xlu0 %430
      %434 = vrot.lane.b32.xlu0 %v398, 16
      %v435 = vpop.permute.xlu0 %434
      %438 = vrot.lane.b32.xlu0 %v384, 32
      %v439 = vpop.permute.xlu0 %438
      %442 = vrot.lane.b32.xlu0 %v400, 48
      %v443 = vpop.permute.xlu0 %442
      %446 = vrot.lane.b32.xlu0 %v392, 64
      %v447 = vpop.permute.xlu0 %446
      %450 = vrot.lane.b32.xlu0 %v402, 80
      %v451 = vpop.permute.xlu0 %450
      %454 = vrot.lane.b32.xlu0 %v396, 96
      %v455 = vpop.permute.xlu0 %454
      %458 = vrot.lane.b32.xlu0 %v404, 112
      %v459 = vpop.permute.xlu0 %458
      %vm461 = vcmask 130048
      %v462 = vsel %vm461, %v324, %v407
      %vm463 = vcmask 261120
      %v464 = vsel %vm463, %v462, %v411
      %vm465 = vcmask 392192
      %v466 = vsel %vm465, %v464, %v415
      %vm467 = vcmask 523264
      %v468 = vsel %vm467, %v466, %v419
      %vm469 = vcmask 654336
      %v470 = vsel %vm469, %v468, %v423
      %vm471 = vcmask 785408
      %v472 = vsel %vm471, %v470, %v427
      %vm473 = vcmask 916480
      %v474 = vsel %vm473, %v472, %v431
      %v475 = vsel %vm461, %v380, %v435
      %v476 = vsel %vm463, %v475, %v439
      %v477 = vsel %vm465, %v476, %v443
      %v478 = vsel %vm467, %v477, %v447
      %v479 = vsel %vm469, %v478, %v451
      %v480 = vsel %vm471, %v479, %v455
      %v481 = vsel %vm473, %v480, %v459
      %482 = vst [vmem:[#allocation3] sm:$0xf] %v474
      %483 = vst [vmem:[#allocation3 + $0x8] sm:$0xf] %v481
      %v484 = vld [vmem:[#allocation2 + $0x6] sm:$0xff]
      %v485 = vld [vmem:[#allocation2 + $0xe] sm:$0xff]
      %v486 = vld [vmem:[#allocation2 + $0x26] sm:$0xff]
      %v487 = vld [vmem:[#allocation2 + $0x2e] sm:$0xff]
      %v488 = vld [vmem:[#allocation2 + $0x46] sm:$0xff]
      %v489 = vld [vmem:[#allocation2 + $0x4e] sm:$0xff]
      %v490 = vld [vmem:[#allocation2 + $0x66] sm:$0xff]
      %v491 = vld [vmem:[#allocation2 + $0x6e] sm:$0xff]
      %500 = vrot.lane.b32.xlu0 %v484, 126
      %v501 = vpop.permute.xlu0 %500
      %502 = vrot.lane.b32.xlu0 %v485, 126
      %v503 = vpop.permute.xlu0 %502
      %504 = vrot.lane.b32.xlu0 %v486, 126
      %v505 = vpop.permute.xlu0 %504
      %506 = vrot.lane.b32.xlu0 %v487, 126
      %v507 = vpop.permute.xlu0 %506
      %508 = vrot.lane.b32.xlu0 %v488, 126
      %v509 = vpop.permute.xlu0 %508
      %510 = vrot.lane.b32.xlu0 %v489, 126
      %v511 = vpop.permute.xlu0 %510
      %512 = vrot.lane.b32.xlu0 %v490, 126
      %v513 = vpop.permute.xlu0 %512
      %514 = vrot.lane.b32.xlu0 %v491, 126
      %v515 = vpop.permute.xlu0 %514
      %v524 = vrot.slane %v509, 4
      %v525 = vsel %vm293, %v524, %v501
      %v526 = vrot.slane %v501, 4
      %v527 = vsel %vm293, %v509, %v526
      %v529 = vunpack.c.l.s4 1983009808
      %v530 = vunpack.c.0.s8 %v529
      %v531 = vperm.slane %v525, %v530
      %v533 = vunpack.c.l.s4 1983009808
      %v534 = vunpack.c.0.s8 %v533
      %v535 = vperm.slane %v527, %v534
      %v536 = vrot.slane %v513, 4
      %v537 = vsel %vm293, %v536, %v505
      %v538 = vrot.slane %v505, 4
      %v539 = vsel %vm293, %v513, %v538
      %v541 = vunpack.c.l.s4 1983009808
      %v542 = vunpack.c.0.s8 %v541
      %v543 = vperm.slane %v537, %v542
      %v545 = vunpack.c.l.s4 1983009808
      %v546 = vunpack.c.0.s8 %v545
      %v547 = vperm.slane %v539, %v546
      %v548 = vrot.slane %v543, 4
      %v549 = vsel %vm293, %v548, %v531
      %v550 = vrot.slane %v531, 4
      %v551 = vsel %vm293, %v543, %v550
      %v553 = vunpack.c.l.s4 1934713408
      %v554 = vunpack.c.0.s8 %v553
      %v555 = vperm.slane %v549, %v554
      %v557 = vunpack.c.l.s4 1934713408
      %v558 = vunpack.c.0.s8 %v557
      %v559 = vperm.slane %v551, %v558
      %v560 = vrot.slane %v547, 4
      %v561 = vsel %vm293, %v560, %v535
      %v562 = vrot.slane %v535, 4
      %v563 = vsel %vm293, %v547, %v562
      %v565 = vunpack.c.l.s4 1934713408
      %v566 = vunpack.c.0.s8 %v565
      %v567 = vperm.slane %v561, %v566
      %v569 = vunpack.c.l.s4 1934713408
      %v570 = vunpack.c.0.s8 %v569
      %v571 = vperm.slane %v563, %v570
      %v572 = vrot.slane %v555, 4
      %v573 = vsel %vm293, 0.0, %v572
      %v574 = vrot.slane %v559, 4
      %v575 = vsel %vm293, 0.0, %v574
      %v576 = vrot.slane %v567, 4
      %v577 = vsel %vm293, 0.0, %v576
      %v578 = vrot.slane %v571, 4
      %v579 = vsel %vm293, 0.0, %v578
      %v580 = vrot.slane %v511, 4
      %v581 = vsel %vm293, %v580, %v503
      %v582 = vrot.slane %v503, 4
      %v583 = vsel %vm293, %v511, %v582
      %v585 = vunpack.c.l.s4 1983009808
      %v586 = vunpack.c.0.s8 %v585
      %v587 = vperm.slane %v581, %v586
      %v589 = vunpack.c.l.s4 1983009808
      %v590 = vunpack.c.0.s8 %v589
      %v591 = vperm.slane %v583, %v590
      %v592 = vrot.slane %v515, 4
      %v593 = vsel %vm293, %v592, %v507
      %v594 = vrot.slane %v507, 4
      %v595 = vsel %vm293, %v515, %v594
      %v597 = vunpack.c.l.s4 1983009808
      %v598 = vunpack.c.0.s8 %v597
      %v599 = vperm.slane %v593, %v598
      %v601 = vunpack.c.l.s4 1983009808
      %v602 = vunpack.c.0.s8 %v601
      %v603 = vperm.slane %v595, %v602
      %v604 = vrot.slane %v599, 4
      %v605 = vsel %vm293, %v604, %v587
      %v606 = vrot.slane %v587, 4
      %v607 = vsel %vm293, %v599, %v606
      %v609 = vunpack.c.l.s4 1934713408
      %v610 = vunpack.c.0.s8 %v609
      %v611 = vperm.slane %v605, %v610
      %v613 = vunpack.c.l.s4 1934713408
      %v614 = vunpack.c.0.s8 %v613
      %v615 = vperm.slane %v607, %v614
      %v616 = vrot.slane %v603, 4
      %v617 = vsel %vm293, %v616, %v591
      %v618 = vrot.slane %v591, 4
      %v619 = vsel %vm293, %v603, %v618
      %v621 = vunpack.c.l.s4 1934713408
      %v622 = vunpack.c.0.s8 %v621
      %v623 = vperm.slane %v617, %v622
      %v625 = vunpack.c.l.s4 1934713408
      %v626 = vunpack.c.0.s8 %v625
      %v627 = vperm.slane %v619, %v626
      %v628 = vrot.slane %v611, 4
      %v629 = vsel %vm293, 0.0, %v628
      %v630 = vrot.slane %v615, 4
      %v631 = vsel %vm293, 0.0, %v630
      %v632 = vrot.slane %v623, 4
      %v633 = vsel %vm293, 0.0, %v632
      %v634 = vrot.slane %v627, 4
      %v635 = vsel %vm293, 0.0, %v634
      %637 = vrot.lane.b32.xlu0 %v573, 16
      %v638 = vpop.permute.xlu0 %637
      %641 = vrot.lane.b32.xlu0 %v559, 32
      %v642 = vpop.permute.xlu0 %641
      %645 = vrot.lane.b32.xlu0 %v575, 48
      %v646 = vpop.permute.xlu0 %645
      %649 = vrot.lane.b32.xlu0 %v567, 64
      %v650 = vpop.permute.xlu0 %649
      %653 = vrot.lane.b32.xlu0 %v577, 80
      %v654 = vpop.permute.xlu0 %653
      %657 = vrot.lane.b32.xlu0 %v571, 96
      %v658 = vpop.permute.xlu0 %657
      %661 = vrot.lane.b32.xlu0 %v579, 112
      %v662 = vpop.permute.xlu0 %661
      %665 = vrot.lane.b32.xlu0 %v629, 16
      %v666 = vpop.permute.xlu0 %665
      %669 = vrot.lane.b32.xlu0 %v615, 32
      %v670 = vpop.permute.xlu0 %669
      %673 = vrot.lane.b32.xlu0 %v631, 48
      %v674 = vpop.permute.xlu0 %673
      %677 = vrot.lane.b32.xlu0 %v623, 64
      %v678 = vpop.permute.xlu0 %677
      %681 = vrot.lane.b32.xlu0 %v633, 80
      %v682 = vpop.permute.xlu0 %681
      %685 = vrot.lane.b32.xlu0 %v627, 96
      %v686 = vpop.permute.xlu0 %685
      %689 = vrot.lane.b32.xlu0 %v635, 112
      %v690 = vpop.permute.xlu0 %689
      %v692 = vsel %vm461, %v555, %v638
      %v693 = vsel %vm463, %v692, %v642
      %v694 = vsel %vm465, %v693, %v646
      %v695 = vsel %vm467, %v694, %v650
      %v696 = vsel %vm469, %v695, %v654
      %v697 = vsel %vm471, %v696, %v658
      %v698 = vsel %vm473, %v697, %v662
      %v699 = vsel %vm461, %v611, %v666
      %v700 = vsel %vm463, %v699, %v670
      %v701 = vsel %vm465, %v700, %v674
      %v702 = vsel %vm467, %v701, %v678
      %v703 = vsel %vm469, %v702, %v682
      %v704 = vsel %vm471, %v703, %v686
      %v705 = vsel %vm473, %v704, %v690
      %v708 = vrot.slane %v698, 4
      %v709 = vrot.slane %v705, 4
      %712 = vst [vmem:[#allocation3] sm:$0xf0] %v708
      %713 = vst [vmem:[#allocation3 + $0x8] sm:$0xf0] %v709
      %v714 = vld [vmem:[#allocation2 + $0x6] sm:$0xff]
      %v715 = vld [vmem:[#allocation2 + $0xe] sm:$0xff]
      %v716 = vld [vmem:[#allocation2 + $0x26] sm:$0xff]
      %v717 = vld [vmem:[#allocation2 + $0x2e] sm:$0xff]
      %v718 = vld [vmem:[#allocation2 + $0x46] sm:$0xff]
      %v719 = vld [vmem:[#allocation2 + $0x4e] sm:$0xff]
      %v720 = vld [vmem:[#allocation2 + $0x66] sm:$0xff]
      %v721 = vld [vmem:[#allocation2 + $0x6e] sm:$0xff]
      %730 = vrot.lane.b32.xlu0 %v714, 124
      %v731 = vpop.permute.xlu0 %730
      %732 = vrot.lane.b32.xlu0 %v715, 124
      %v733 = vpop.permute.xlu0 %732
      %734 = vrot.lane.b32.xlu0 %v716, 124
      %v735 = vpop.permute.xlu0 %734
      %736 = vrot.lane.b32.xlu0 %v717, 124
      %v737 = vpop.permute.xlu0 %736
      %738 = vrot.lane.b32.xlu0 %v718, 124
      %v739 = vpop.permute.xlu0 %738
      %740 = vrot.lane.b32.xlu0 %v719, 124
      %v741 = vpop.permute.xlu0 %740
      %742 = vrot.lane.b32.xlu0 %v720, 124
      %v743 = vpop.permute.xlu0 %742
      %744 = vrot.lane.b32.xlu0 %v721, 124
      %v745 = vpop.permute.xlu0 %744
      %v754 = vrot.slane %v739, 4
      %v755 = vsel %vm293, %v754, %v731
      %v756 = vrot.slane %v731, 4
      %v757 = vsel %vm293, %v739, %v756
      %v759 = vunpack.c.l.s4 1983009808
      %v760 = vunpack.c.0.s8 %v759
      %v761 = vperm.slane %v755, %v760
      %v763 = vunpack.c.l.s4 1983009808
      %v764 = vunpack.c.0.s8 %v763
      %v765 = vperm.slane %v757, %v764
      %v766 = vrot.slane %v743, 4
      %v767 = vsel %vm293, %v766, %v735
      %v768 = vrot.slane %v735, 4
      %v769 = vsel %vm293, %v743, %v768
      %v771 = vunpack.c.l.s4 1983009808
      %v772 = vunpack.c.0.s8 %v771
      %v773 = vperm.slane %v767, %v772
      %v775 = vunpack.c.l.s4 1983009808
      %v776 = vunpack.c.0.s8 %v775
      %v777 = vperm.slane %v769, %v776
      %v778 = vrot.slane %v773, 4
      %v779 = vsel %vm293, %v778, %v761
      %v780 = vrot.slane %v761, 4
      %v781 = vsel %vm293, %v773, %v780
      %v783 = vunpack.c.l.s4 1934713408
      %v784 = vunpack.c.0.s8 %v783
      %v785 = vperm.slane %v779, %v784
      %v787 = vunpack.c.l.s4 1934713408
      %v788 = vunpack.c.0.s8 %v787
      %v789 = vperm.slane %v781, %v788
      %v790 = vrot.slane %v777, 4
      %v791 = vsel %vm293, %v790, %v765
      %v792 = vrot.slane %v765, 4
      %v793 = vsel %vm293, %v777, %v792
      %v795 = vunpack.c.l.s4 1934713408
      %v796 = vunpack.c.0.s8 %v795
      %v797 = vperm.slane %v791, %v796
      %v799 = vunpack.c.l.s4 1934713408
      %v800 = vunpack.c.0.s8 %v799
      %v801 = vperm.slane %v793, %v800
      %v802 = vrot.slane %v785, 4
      %v803 = vsel %vm293, 0.0, %v802
      %v804 = vrot.slane %v789, 4
      %v805 = vsel %vm293, 0.0, %v804
      %v806 = vrot.slane %v797, 4
      %v807 = vsel %vm293, 0.0, %v806
      %v808 = vrot.slane %v801, 4
      %v809 = vsel %vm293, 0.0, %v808
      %v810 = vrot.slane %v741, 4
      %v811 = vsel %vm293, %v810, %v733
      %v812 = vrot.slane %v733, 4
      %v813 = vsel %vm293, %v741, %v812
      %v815 = vunpack.c.l.s4 1983009808
      %v816 = vunpack.c.0.s8 %v815
      %v817 = vperm.slane %v811, %v816
      %v819 = vunpack.c.l.s4 1983009808
      %v820 = vunpack.c.0.s8 %v819
      %v821 = vperm.slane %v813, %v820
      %v822 = vrot.slane %v745, 4
      %v823 = vsel %vm293, %v822, %v737
      %v824 = vrot.slane %v737, 4
      %v825 = vsel %vm293, %v745, %v824
      %v827 = vunpack.c.l.s4 1983009808
      %v828 = vunpack.c.0.s8 %v827
      %v829 = vperm.slane %v823, %v828
      %v831 = vunpack.c.l.s4 1983009808
      %v832 = vunpack.c.0.s8 %v831
      %v833 = vperm.slane %v825, %v832
      %v834 = vrot.slane %v829, 4
      %v835 = vsel %vm293, %v834, %v817
      %v836 = vrot.slane %v817, 4
      %v837 = vsel %vm293, %v829, %v836
      %v839 = vunpack.c.l.s4 1934713408
      %v840 = vunpack.c.0.s8 %v839
      %v841 = vperm.slane %v835, %v840
      %v843 = vunpack.c.l.s4 1934713408
      %v844 = vunpack.c.0.s8 %v843
      %v845 = vperm.slane %v837, %v844
      %v846 = vrot.slane %v833, 4
      %v847 = vsel %vm293, %v846, %v821
      %v848 = vrot.slane %v821, 4
      %v849 = vsel %vm293, %v833, %v848
      %v851 = vunpack.c.l.s4 1934713408
      %v852 = vunpack.c.0.s8 %v851
      %v853 = vperm.slane %v847, %v852
      %v855 = vunpack.c.l.s4 1934713408
      %v856 = vunpack.c.0.s8 %v855
      %v857 = vperm.slane %v849, %v856
      %v858 = vrot.slane %v841, 4
      %v859 = vsel %vm293, 0.0, %v858
      %v860 = vrot.slane %v845, 4
      %v861 = vsel %vm293, 0.0, %v860
      %v862 = vrot.slane %v853, 4
      %v863 = vsel %vm293, 0.0, %v862
      %v864 = vrot.slane %v857, 4
      %v865 = vsel %vm293, 0.0, %v864
      %867 = vrot.lane.b32.xlu0 %v803, 16
      %v868 = vpop.permute.xlu0 %867
      %871 = vrot.lane.b32.xlu0 %v789, 32
      %v872 = vpop.permute.xlu0 %871
      %875 = vrot.lane.b32.xlu0 %v805, 48
      %v876 = vpop.permute.xlu0 %875
      %879 = vrot.lane.b32.xlu0 %v797, 64
      %v880 = vpop.permute.xlu0 %879
      %883 = vrot.lane.b32.xlu0 %v807, 80
      %v884 = vpop.permute.xlu0 %883
      %887 = vrot.lane.b32.xlu0 %v801, 96
      %v888 = vpop.permute.xlu0 %887
      %891 = vrot.lane.b32.xlu0 %v809, 112
      %v892 = vpop.permute.xlu0 %891
      %895 = vrot.lane.b32.xlu0 %v859, 16
      %v896 = vpop.permute.xlu0 %895
      %899 = vrot.lane.b32.xlu0 %v845, 32
      %v900 = vpop.permute.xlu0 %899
      %903 = vrot.lane.b32.xlu0 %v861, 48
      %v904 = vpop.permute.xlu0 %903
      %907 = vrot.lane.b32.xlu0 %v853, 64
      %v908 = vpop.permute.xlu0 %907
      %911 = vrot.lane.b32.xlu0 %v863, 80
      %v912 = vpop.permute.xlu0 %911
      %915 = vrot.lane.b32.xlu0 %v857, 96
      %v916 = vpop.permute.xlu0 %915
      %919 = vrot.lane.b32.xlu0 %v865, 112
      %v920 = vpop.permute.xlu0 %919
      %v922 = vsel %vm461, %v785, %v868
      %v923 = vsel %vm463, %v922, %v872
      %v924 = vsel %vm465, %v923, %v876
      %v925 = vsel %vm467, %v924, %v880
      %v926 = vsel %vm469, %v925, %v884
      %v927 = vsel %vm471, %v926, %v888
      %v928 = vsel %vm473, %v927, %v892
      %v929 = vsel %vm461, %v841, %v896
      %v930 = vsel %vm463, %v929, %v900
      %v931 = vsel %vm465, %v930, %v904
      %v932 = vsel %vm467, %v931, %v908
      %v933 = vsel %vm469, %v932, %v912
      %v934 = vsel %vm471, %v933, %v916
      %v935 = vsel %vm473, %v934, %v920
      %936 = vst [vmem:[#allocation3 + $0x10] sm:$0xf] %v928
      %937 = vst [vmem:[#allocation3 + $0x18] sm:$0xf] %v935
      %v938 = vld [vmem:[#allocation2 + $0x8] sm:$0xff]
      %v939 = vld [vmem:[#allocation2 + $0x10] sm:$0xff]
      %v940 = vld [vmem:[#allocation2 + $0x28] sm:$0xff]
      %v941 = vld [vmem:[#allocation2 + $0x30] sm:$0xff]
      %v942 = vld [vmem:[#allocation2 + $0x48] sm:$0xff]
      %v943 = vld [vmem:[#allocation2 + $0x50] sm:$0xff]
      %v944 = vld [vmem:[#allocation2 + $0x68] sm:$0xff]
      %v945 = vld [vmem:[#allocation2 + $0x70] sm:$0xff]
      %v946 = vrot.slane %v942, 4
      %v947 = vsel %vm293, %v946, %v938
      %v948 = vrot.slane %v938, 4
      %v949 = vsel %vm293, %v942, %v948
      %v951 = vunpack.c.l.s4 1983009808
      %v952 = vunpack.c.0.s8 %v951
      %v953 = vperm.slane %v947, %v952
      %v955 = vunpack.c.l.s4 1983009808
      %v956 = vunpack.c.0.s8 %v955
      %v957 = vperm.slane %v949, %v956
      %v958 = vrot.slane %v944, 4
      %v959 = vsel %vm293, %v958, %v940
      %v960 = vrot.slane %v940, 4
      %v961 = vsel %vm293, %v944, %v960
      %v963 = vunpack.c.l.s4 1983009808
      %v964 = vunpack.c.0.s8 %v963
      %v965 = vperm.slane %v959, %v964
      %v967 = vunpack.c.l.s4 1983009808
      %v968 = vunpack.c.0.s8 %v967
      %v969 = vperm.slane %v961, %v968
      %v970 = vrot.slane %v965, 4
      %v971 = vsel %vm293, %v970, %v953
      %v972 = vrot.slane %v953, 4
      %v973 = vsel %vm293, %v965, %v972
      %v975 = vunpack.c.l.s4 1934713408
      %v976 = vunpack.c.0.s8 %v975
      %v977 = vperm.slane %v971, %v976
      %v979 = vunpack.c.l.s4 1934713408
      %v980 = vunpack.c.0.s8 %v979
      %v981 = vperm.slane %v973, %v980
      %v982 = vrot.slane %v969, 4
      %v983 = vsel %vm293, %v982, %v957
      %v984 = vrot.slane %v957, 4
      %v985 = vsel %vm293, %v969, %v984
      %v987 = vunpack.c.l.s4 1934713408
      %v988 = vunpack.c.0.s8 %v987
      %v989 = vperm.slane %v983, %v988
      %v991 = vunpack.c.l.s4 1934713408
      %v992 = vunpack.c.0.s8 %v991
      %v993 = vperm.slane %v985, %v992
      %v994 = vrot.slane %v977, 4
      %v995 = vsel %vm293, 0.0, %v994
      %v996 = vrot.slane %v981, 4
      %v997 = vsel %vm293, 0.0, %v996
      %v998 = vrot.slane %v989, 4
      %v999 = vsel %vm293, 0.0, %v998
      %v1000 = vrot.slane %v993, 4
      %v1001 = vsel %vm293, 0.0, %v1000
      %v1002 = vrot.slane %v943, 4
      %v1003 = vsel %vm293, %v1002, %v939
      %v1004 = vrot.slane %v939, 4
      %v1005 = vsel %vm293, %v943, %v1004
      %v1007 = vunpack.c.l.s4 1983009808
      %v1008 = vunpack.c.0.s8 %v1007
      %v1009 = vperm.slane %v1003, %v1008
      %v1011 = vunpack.c.l.s4 1983009808
      %v1012 = vunpack.c.0.s8 %v1011
      %v1013 = vperm.slane %v1005, %v1012
      %v1014 = vrot.slane %v945, 4
      %v1015 = vsel %vm293, %v1014, %v941
      %v1016 = vrot.slane %v941, 4
      %v1017 = vsel %vm293, %v945, %v1016
      %v1019 = vunpack.c.l.s4 1983009808
      %v1020 = vunpack.c.0.s8 %v1019
      %v1021 = vperm.slane %v1015, %v1020
      %v1023 = vunpack.c.l.s4 1983009808
      %v1024 = vunpack.c.0.s8 %v1023
      %v1025 = vperm.slane %v1017, %v1024
      %v1026 = vrot.slane %v1021, 4
      %v1027 = vsel %vm293, %v1026, %v1009
      %v1028 = vrot.slane %v1009, 4
      %v1029 = vsel %vm293, %v1021, %v1028
      %v1031 = vunpack.c.l.s4 1934713408
      %v1032 = vunpack.c.0.s8 %v1031
      %v1033 = vperm.slane %v1027, %v1032
      %v1035 = vunpack.c.l.s4 1934713408
      %v1036 = vunpack.c.0.s8 %v1035
      %v1037 = vperm.slane %v1029, %v1036
      %v1038 = vrot.slane %v1025, 4
      %v1039 = vsel %vm293, %v1038, %v1013
      %v1040 = vrot.slane %v1013, 4
      %v1041 = vsel %vm293, %v1025, %v1040
      %v1043 = vunpack.c.l.s4 1934713408
      %v1044 = vunpack.c.0.s8 %v1043
      %v1045 = vperm.slane %v1039, %v1044
      %v1047 = vunpack.c.l.s4 1934713408
      %v1048 = vunpack.c.0.s8 %v1047
      %v1049 = vperm.slane %v1041, %v1048
      %v1050 = vrot.slane %v1033, 4
      %v1051 = vsel %vm293, 0.0, %v1050
      %v1052 = vrot.slane %v1037, 4
      %v1053 = vsel %vm293, 0.0, %v1052
      %v1054 = vrot.slane %v1045, 4
      %v1055 = vsel %vm293, 0.0, %v1054
      %v1056 = vrot.slane %v1049, 4
      %v1057 = vsel %vm293, 0.0, %v1056
      %1059 = vrot.lane.b32.xlu0 %v995, 16
      %v1060 = vpop.permute.xlu0 %1059
      %1063 = vrot.lane.b32.xlu0 %v981, 32
      %v1064 = vpop.permute.xlu0 %1063
      %1067 = vrot.lane.b32.xlu0 %v997, 48
      %v1068 = vpop.permute.xlu0 %1067
      %1071 = vrot.lane.b32.xlu0 %v989, 64
      %v1072 = vpop.permute.xlu0 %1071
      %1075 = vrot.lane.b32.xlu0 %v999, 80
      %v1076 = vpop.permute.xlu0 %1075
      %1079 = vrot.lane.b32.xlu0 %v993, 96
      %v1080 = vpop.permute.xlu0 %1079
      %1083 = vrot.lane.b32.xlu0 %v1001, 112
      %v1084 = vpop.permute.xlu0 %1083
      %1087 = vrot.lane.b32.xlu0 %v1051, 16
      %v1088 = vpop.permute.xlu0 %1087
      %1091 = vrot.lane.b32.xlu0 %v1037, 32
      %v1092 = vpop.permute.xlu0 %1091
      %1095 = vrot.lane.b32.xlu0 %v1053, 48
      %v1096 = vpop.permute.xlu0 %1095
      %1099 = vrot.lane.b32.xlu0 %v1045, 64
      %v1100 = vpop.permute.xlu0 %1099
      %1103 = vrot.lane.b32.xlu0 %v1055, 80
      %v1104 = vpop.permute.xlu0 %1103
      %1107 = vrot.lane.b32.xlu0 %v1049, 96
      %v1108 = vpop.permute.xlu0 %1107
      %1111 = vrot.lane.b32.xlu0 %v1057, 112
      %v1112 = vpop.permute.xlu0 %1111
      %v1114 = vsel %vm461, %v977, %v1060
      %v1115 = vsel %vm463, %v1114, %v1064
      %v1116 = vsel %vm465, %v1115, %v1068
      %v1117 = vsel %vm467, %v1116, %v1072
      %v1118 = vsel %vm469, %v1117, %v1076
      %v1119 = vsel %vm471, %v1118, %v1080
      %v1120 = vsel %vm473, %v1119, %v1084
      %v1121 = vsel %vm461, %v1033, %v1088
      %v1122 = vsel %vm463, %v1121, %v1092
      %v1123 = vsel %vm465, %v1122, %v1096
      %v1124 = vsel %vm467, %v1123, %v1100
      %v1125 = vsel %vm469, %v1124, %v1104
      %v1126 = vsel %vm471, %v1125, %v1108
      %v1127 = vsel %vm473, %v1126, %v1112
      %v1130 = vrot.slane %v1120, 4
      %v1131 = vrot.slane %v1127, 4
      %1134 = vst [vmem:[#allocation3 + $0x10] sm:$0xf0] %v1130
      %1135 = vst [vmem:[#allocation3 + $0x18] sm:$0xf0] %v1131
      %v1136 = vld [vmem:[#allocation2 + $0x8] sm:$0xff]
      %v1137 = vld [vmem:[#allocation2 + $0x10] sm:$0xff]
      %v1138 = vld [vmem:[#allocation2 + $0x28] sm:$0xff]
      %v1139 = vld [vmem:[#allocation2 + $0x30] sm:$0xff]
      %v1140 = vld [vmem:[#allocation2 + $0x48] sm:$0xff]
      %v1141 = vld [vmem:[#allocation2 + $0x50] sm:$0xff]
      %v1142 = vld [vmem:[#allocation2 + $0x68] sm:$0xff]
      %v1143 = vld [vmem:[#allocation2 + $0x70] sm:$0xff]
      %1152 = vrot.lane.b32.xlu0 %v1136, 126
      %v1153 = vpop.permute.xlu0 %1152
      %1154 = vrot.lane.b32.xlu0 %v1137, 126
      %v1155 = vpop.permute.xlu0 %1154
      %1156 = vrot.lane.b32.xlu0 %v1138, 126
      %v1157 = vpop.permute.xlu0 %1156
      %1158 = vrot.lane.b32.xlu0 %v1139, 126
      %v1159 = vpop.permute.xlu0 %1158
      %1160 = vrot.lane.b32.xlu0 %v1140, 126
      %v1161 = vpop.permute.xlu0 %1160
      %1162 = vrot.lane.b32.xlu0 %v1141, 126
      %v1163 = vpop.permute.xlu0 %1162
      %1164 = vrot.lane.b32.xlu0 %v1142, 126
      %v1165 = vpop.permute.xlu0 %1164
      %1166 = vrot.lane.b32.xlu0 %v1143, 126
      %v1167 = vpop.permute.xlu0 %1166
      %v1176 = vrot.slane %v1161, 4
      %v1177 = vsel %vm293, %v1176, %v1153
      %v1178 = vrot.slane %v1153, 4
      %v1179 = vsel %vm293, %v1161, %v1178
      %v1181 = vunpack.c.l.s4 1983009808
      %v1182 = vunpack.c.0.s8 %v1181
      %v1183 = vperm.slane %v1177, %v1182
      %v1185 = vunpack.c.l.s4 1983009808
      %v1186 = vunpack.c.0.s8 %v1185
      %v1187 = vperm.slane %v1179, %v1186
      %v1188 = vrot.slane %v1165, 4
      %v1189 = vsel %vm293, %v1188, %v1157
      %v1190 = vrot.slane %v1157, 4
      %v1191 = vsel %vm293, %v1165, %v1190
      %v1193 = vunpack.c.l.s4 1983009808
      %v1194 = vunpack.c.0.s8 %v1193
      %v1195 = vperm.slane %v1189, %v1194
      %v1197 = vunpack.c.l.s4 1983009808
      %v1198 = vunpack.c.0.s8 %v1197
      %v1199 = vperm.slane %v1191, %v1198
      %v1200 = vrot.slane %v1195, 4
      %v1201 = vsel %vm293, %v1200, %v1183
      %v1202 = vrot.slane %v1183, 4
      %v1203 = vsel %vm293, %v1195, %v1202
      %v1205 = vunpack.c.l.s4 1934713408
      %v1206 = vunpack.c.0.s8 %v1205
      %v1207 = vperm.slane %v1201, %v1206
      %v1209 = vunpack.c.l.s4 1934713408
      %v1210 = vunpack.c.0.s8 %v1209
      %v1211 = vperm.slane %v1203, %v1210
      %v1212 = vrot.slane %v1199, 4
      %v1213 = vsel %vm293, %v1212, %v1187
      %v1214 = vrot.slane %v1187, 4
      %v1215 = vsel %vm293, %v1199, %v1214
      %v1217 = vunpack.c.l.s4 1934713408
      %v1218 = vunpack.c.0.s8 %v1217
      %v1219 = vperm.slane %v1213, %v1218
      %v1221 = vunpack.c.l.s4 1934713408
      %v1222 = vunpack.c.0.s8 %v1221
      %v1223 = vperm.slane %v1215, %v1222
      %v1224 = vrot.slane %v1207, 4
      %v1225 = vsel %vm293, 0.0, %v1224
      %v1226 = vrot.slane %v1211, 4
      %v1227 = vsel %vm293, 0.0, %v1226
      %v1228 = vrot.slane %v1219, 4
      %v1229 = vsel %vm293, 0.0, %v1228
      %v1230 = vrot.slane %v1223, 4
      %v1231 = vsel %vm293, 0.0, %v1230
      %v1232 = vrot.slane %v1163, 4
      %v1233 = vsel %vm293, %v1232, %v1155
      %v1234 = vrot.slane %v1155, 4
      %v1235 = vsel %vm293, %v1163, %v1234
      %v1237 = vunpack.c.l.s4 1983009808
      %v1238 = vunpack.c.0.s8 %v1237
      %v1239 = vperm.slane %v1233, %v1238
      %v1241 = vunpack.c.l.s4 1983009808
      %v1242 = vunpack.c.0.s8 %v1241
      %v1243 = vperm.slane %v1235, %v1242
      %v1244 = vrot.slane %v1167, 4
      %v1245 = vsel %vm293, %v1244, %v1159
      %v1246 = vrot.slane %v1159, 4
      %v1247 = vsel %vm293, %v1167, %v1246
      %v1249 = vunpack.c.l.s4 1983009808
      %v1250 = vunpack.c.0.s8 %v1249
      %v1251 = vperm.slane %v1245, %v1250
      %v1253 = vunpack.c.l.s4 1983009808
      %v1254 = vunpack.c.0.s8 %v1253
      %v1255 = vperm.slane %v1247, %v1254
      %v1256 = vrot.slane %v1251, 4
      %v1257 = vsel %vm293, %v1256, %v1239
      %v1258 = vrot.slane %v1239, 4
      %v1259 = vsel %vm293, %v1251, %v1258
      %v1261 = vunpack.c.l.s4 1934713408
      %v1262 = vunpack.c.0.s8 %v1261
      %v1263 = vperm.slane %v1257, %v1262
      %v1265 = vunpack.c.l.s4 1934713408
      %v1266 = vunpack.c.0.s8 %v1265
      %v1267 = vperm.slane %v1259, %v1266
      %v1268 = vrot.slane %v1255, 4
      %v1269 = vsel %vm293, %v1268, %v1243
      %v1270 = vrot.slane %v1243, 4
      %v1271 = vsel %vm293, %v1255, %v1270
      %v1273 = vunpack.c.l.s4 1934713408
      %v1274 = vunpack.c.0.s8 %v1273
      %v1275 = vperm.slane %v1269, %v1274
      %v1277 = vunpack.c.l.s4 1934713408
      %v1278 = vunpack.c.0.s8 %v1277
      %v1279 = vperm.slane %v1271, %v1278
      %v1280 = vrot.slane %v1263, 4
      %v1281 = vsel %vm293, 0.0, %v1280
      %v1282 = vrot.slane %v1267, 4
      %v1283 = vsel %vm293, 0.0, %v1282
      %v1284 = vrot.slane %v1275, 4
      %v1285 = vsel %vm293, 0.0, %v1284
      %v1286 = vrot.slane %v1279, 4
      %v1287 = vsel %vm293, 0.0, %v1286
      %1289 = vrot.lane.b32.xlu0 %v1225, 16
      %v1290 = vpop.permute.xlu0 %1289
      %1293 = vrot.lane.b32.xlu0 %v1211, 32
      %v1294 = vpop.permute.xlu0 %1293
      %1297 = vrot.lane.b32.xlu0 %v1227, 48
      %v1298 = vpop.permute.xlu0 %1297
      %1301 = vrot.lane.b32.xlu0 %v1219, 64
      %v1302 = vpop.permute.xlu0 %1301
      %1305 = vrot.lane.b32.xlu0 %v1229, 80
      %v1306 = vpop.permute.xlu0 %1305
      %1309 = vrot.lane.b32.xlu0 %v1223, 96
      %v1310 = vpop.permute.xlu0 %1309
      %1313 = vrot.lane.b32.xlu0 %v1231, 112
      %v1314 = vpop.permute.xlu0 %1313
      %1317 = vrot.lane.b32.xlu0 %v1281, 16
      %v1318 = vpop.permute.xlu0 %1317
      %1321 = vrot.lane.b32.xlu0 %v1267, 32
      %v1322 = vpop.permute.xlu0 %1321
      %1325 = vrot.lane.b32.xlu0 %v1283, 48
      %v1326 = vpop.permute.xlu0 %1325
      %1329 = vrot.lane.b32.xlu0 %v1275, 64
      %v1330 = vpop.permute.xlu0 %1329
      %1333 = vrot.lane.b32.xlu0 %v1285, 80
      %v1334 = vpop.permute.xlu0 %1333
      %1337 = vrot.lane.b32.xlu0 %v1279, 96
      %v1338 = vpop.permute.xlu0 %1337
      %1341 = vrot.lane.b32.xlu0 %v1287, 112
      %v1342 = vpop.permute.xlu0 %1341
      %v1344 = vsel %vm461, %v1207, %v1290
      %v1345 = vsel %vm463, %v1344, %v1294
      %v1346 = vsel %vm465, %v1345, %v1298
      %v1347 = vsel %vm467, %v1346, %v1302
      %v1348 = vsel %vm469, %v1347, %v1306
      %v1349 = vsel %vm471, %v1348, %v1310
      %v1350 = vsel %vm473, %v1349, %v1314
      %v1351 = vsel %vm461, %v1263, %v1318
      %v1352 = vsel %vm463, %v1351, %v1322
      %v1353 = vsel %vm465, %v1352, %v1326
      %v1354 = vsel %vm467, %v1353, %v1330
      %v1355 = vsel %vm469, %v1354, %v1334
      %v1356 = vsel %vm471, %v1355, %v1338
      %v1357 = vsel %vm473, %v1356, %v1342
      %1358 = vst [vmem:[#allocation3 + $0x20] sm:$0xf] %v1350
      %1359 = vst [vmem:[#allocation3 + $0x28] sm:$0xf] %v1357
      %v1360 = vld [vmem:[#allocation2 + $0x8] sm:$0xff]
      %v1361 = vld [vmem:[#allocation2 + $0x10] sm:$0xff]
      %v1362 = vld [vmem:[#allocation2 + $0x28] sm:$0xff]
      %v1363 = vld [vmem:[#allocation2 + $0x30] sm:$0xff]
      %v1364 = vld [vmem:[#allocation2 + $0x48] sm:$0xff]
      %v1365 = vld [vmem:[#allocation2 + $0x50] sm:$0xff]
      %v1366 = vld [vmem:[#allocation2 + $0x68] sm:$0xff]
      %v1367 = vld [vmem:[#allocation2 + $0x70] sm:$0xff]
      %1376 = vrot.lane.b32.xlu0 %v1360, 124
      %v1377 = vpop.permute.xlu0 %1376
      %1378 = vrot.lane.b32.xlu0 %v1361, 124
      %v1379 = vpop.permute.xlu0 %1378
      %1380 = vrot.lane.b32.xlu0 %v1362, 124
      %v1381 = vpop.permute.xlu0 %1380
      %1382 = vrot.lane.b32.xlu0 %v1363, 124
      %v1383 = vpop.permute.xlu0 %1382
      %1384 = vrot.lane.b32.xlu0 %v1364, 124
      %v1385 = vpop.permute.xlu0 %1384
      %1386 = vrot.lane.b32.xlu0 %v1365, 124
      %v1387 = vpop.permute.xlu0 %1386
      %1388 = vrot.lane.b32.xlu0 %v1366, 124
      %v1389 = vpop.permute.xlu0 %1388
      %1390 = vrot.lane.b32.xlu0 %v1367, 124
      %v1391 = vpop.permute.xlu0 %1390
      %v1400 = vrot.slane %v1385, 4
      %v1401 = vsel %vm293, %v1400, %v1377
      %v1402 = vrot.slane %v1377, 4
      %v1403 = vsel %vm293, %v1385, %v1402
      %v1405 = vunpack.c.l.s4 1983009808
      %v1406 = vunpack.c.0.s8 %v1405
      %v1407 = vperm.slane %v1401, %v1406
      %v1409 = vunpack.c.l.s4 1983009808
      %v1410 = vunpack.c.0.s8 %v1409
      %v1411 = vperm.slane %v1403, %v1410
      %v1412 = vrot.slane %v1389, 4
      %v1413 = vsel %vm293, %v1412, %v1381
      %v1414 = vrot.slane %v1381, 4
      %v1415 = vsel %vm293, %v1389, %v1414
      %v1417 = vunpack.c.l.s4 1983009808
      %v1418 = vunpack.c.0.s8 %v1417
      %v1419 = vperm.slane %v1413, %v1418
      %v1421 = vunpack.c.l.s4 1983009808
      %v1422 = vunpack.c.0.s8 %v1421
      %v1423 = vperm.slane %v1415, %v1422
      %v1424 = vrot.slane %v1419, 4
      %v1425 = vsel %vm293, %v1424, %v1407
      %v1426 = vrot.slane %v1407, 4
      %v1427 = vsel %vm293, %v1419, %v1426
      %v1429 = vunpack.c.l.s4 1934713408
      %v1430 = vunpack.c.0.s8 %v1429
      %v1431 = vperm.slane %v1425, %v1430
      %v1433 = vunpack.c.l.s4 1934713408
      %v1434 = vunpack.c.0.s8 %v1433
      %v1435 = vperm.slane %v1427, %v1434
      %v1436 = vrot.slane %v1423, 4
      %v1437 = vsel %vm293, %v1436, %v1411
      %v1438 = vrot.slane %v1411, 4
      %v1439 = vsel %vm293, %v1423, %v1438
      %v1441 = vunpack.c.l.s4 1934713408
      %v1442 = vunpack.c.0.s8 %v1441
      %v1443 = vperm.slane %v1437, %v1442
      %v1445 = vunpack.c.l.s4 1934713408
      %v1446 = vunpack.c.0.s8 %v1445
      %v1447 = vperm.slane %v1439, %v1446
      %v1448 = vrot.slane %v1431, 4
      %v1449 = vsel %vm293, 0.0, %v1448
      %v1450 = vrot.slane %v1435, 4
      %v1451 = vsel %vm293, 0.0, %v1450
      %v1452 = vrot.slane %v1443, 4
      %v1453 = vsel %vm293, 0.0, %v1452
      %v1454 = vrot.slane %v1447, 4
      %v1455 = vsel %vm293, 0.0, %v1454
      %v1456 = vrot.slane %v1387, 4
      %v1457 = vsel %vm293, %v1456, %v1379
      %v1458 = vrot.slane %v1379, 4
      %v1459 = vsel %vm293, %v1387, %v1458
      %v1461 = vunpack.c.l.s4 1983009808
      %v1462 = vunpack.c.0.s8 %v1461
      %v1463 = vperm.slane %v1457, %v1462
      %v1465 = vunpack.c.l.s4 1983009808
      %v1466 = vunpack.c.0.s8 %v1465
      %v1467 = vperm.slane %v1459, %v1466
      %v1468 = vrot.slane %v1391, 4
      %v1469 = vsel %vm293, %v1468, %v1383
      %v1470 = vrot.slane %v1383, 4
      %v1471 = vsel %vm293, %v1391, %v1470
      %v1473 = vunpack.c.l.s4 1983009808
      %v1474 = vunpack.c.0.s8 %v1473
      %v1475 = vperm.slane %v1469, %v1474
      %v1477 = vunpack.c.l.s4 1983009808
      %v1478 = vunpack.c.0.s8 %v1477
      %v1479 = vperm.slane %v1471, %v1478
      %v1480 = vrot.slane %v1475, 4
      %v1481 = vsel %vm293, %v1480, %v1463
      %v1482 = vrot.slane %v1463, 4
      %v1483 = vsel %vm293, %v1475, %v1482
      %v1485 = vunpack.c.l.s4 1934713408
      %v1486 = vunpack.c.0.s8 %v1485
      %v1487 = vperm.slane %v1481, %v1486
      %v1489 = vunpack.c.l.s4 1934713408
      %v1490 = vunpack.c.0.s8 %v1489
      %v1491 = vperm.slane %v1483, %v1490
      %v1492 = vrot.slane %v1479, 4
      %v1493 = vsel %vm293, %v1492, %v1467
      %v1494 = vrot.slane %v1467, 4
      %v1495 = vsel %vm293, %v1479, %v1494
      %v1497 = vunpack.c.l.s4 1934713408
      %v1498 = vunpack.c.0.s8 %v1497
      %v1499 = vperm.slane %v1493, %v1498
      %v1501 = vunpack.c.l.s4 1934713408
      %v1502 = vunpack.c.0.s8 %v1501
      %v1503 = vperm.slane %v1495, %v1502
      %v1504 = vrot.slane %v1487, 4
      %v1505 = vsel %vm293, 0.0, %v1504
      %v1506 = vrot.slane %v1491, 4
      %v1507 = vsel %vm293, 0.0, %v1506
      %v1508 = vrot.slane %v1499, 4
      %v1509 = vsel %vm293, 0.0, %v1508
      %v1510 = vrot.slane %v1503, 4
      %v1511 = vsel %vm293, 0.0, %v1510
      %1513 = vrot.lane.b32.xlu0 %v1449, 16
      %v1514 = vpop.permute.xlu0 %1513
      %1517 = vrot.lane.b32.xlu0 %v1435, 32
      %v1518 = vpop.permute.xlu0 %1517
      %1521 = vrot.lane.b32.xlu0 %v1451, 48
      %v1522 = vpop.permute.xlu0 %1521
      %1525 = vrot.lane.b32.xlu0 %v1443, 64
      %v1526 = vpop.permute.xlu0 %1525
      %1529 = vrot.lane.b32.xlu0 %v1453, 80
      %v1530 = vpop.permute.xlu0 %1529
      %1533 = vrot.lane.b32.xlu0 %v1447, 96
      %v1534 = vpop.permute.xlu0 %1533
      %1537 = vrot.lane.b32.xlu0 %v1455, 112
      %v1538 = vpop.permute.xlu0 %1537
      %1541 = vrot.lane.b32.xlu0 %v1505, 16
      %v1542 = vpop.permute.xlu0 %1541
      %1545 = vrot.lane.b32.xlu0 %v1491, 32
      %v1546 = vpop.permute.xlu0 %1545
      %1549 = vrot.lane.b32.xlu0 %v1507, 48
      %v1550 = vpop.permute.xlu0 %1549
      %1553 = vrot.lane.b32.xlu0 %v1499, 64
      %v1554 = vpop.permute.xlu0 %1553
      %1557 = vrot.lane.b32.xlu0 %v1509, 80
      %v1558 = vpop.permute.xlu0 %1557
      %1561 = vrot.lane.b32.xlu0 %v1503, 96
      %v1562 = vpop.permute.xlu0 %1561
      %1565 = vrot.lane.b32.xlu0 %v1511, 112
      %v1566 = vpop.permute.xlu0 %1565
      %v1568 = vsel %vm461, %v1431, %v1514
      %v1569 = vsel %vm463, %v1568, %v1518
      %v1570 = vsel %vm465, %v1569, %v1522
      %v1571 = vsel %vm467, %v1570, %v1526
      %v1572 = vsel %vm469, %v1571, %v1530
      %v1573 = vsel %vm471, %v1572, %v1534
      %v1574 = vsel %vm473, %v1573, %v1538
      %v1575 = vsel %vm461, %v1487, %v1542
      %v1576 = vsel %vm463, %v1575, %v1546
      %v1577 = vsel %vm465, %v1576, %v1550
      %v1578 = vsel %vm467, %v1577, %v1554
      %v1579 = vsel %vm469, %v1578, %v1558
      %v1580 = vsel %vm471, %v1579, %v1562
      %v1581 = vsel %vm473, %v1580, %v1566
      %v1584 = vrot.slane %v1574, 4
      %v1585 = vrot.slane %v1581, 4
      %1588 = vst [vmem:[#allocation3 + $0x20] sm:$0xf0] %v1584
      %1589 = vst [vmem:[#allocation3 + $0x28] sm:$0xf0] %v1585
      %v1590 = vld [vmem:[#allocation2 + $0xa] sm:$0xff]
      %v1591 = vld [vmem:[#allocation2 + $0x12] sm:$0xff]
      %v1592 = vld [vmem:[#allocation2 + $0x2a] sm:$0xff]
      %v1593 = vld [vmem:[#allocation2 + $0x32] sm:$0xff]
      %v1594 = vld [vmem:[#allocation2 + $0x4a] sm:$0xff]
      %v1595 = vld [vmem:[#allocation2 + $0x52] sm:$0xff]
      %v1596 = vld [vmem:[#allocation2 + $0x6a] sm:$0xff]
      %v1597 = vld [vmem:[#allocation2 + $0x72] sm:$0xff]
      %v1598 = vrot.slane %v1594, 4
      %v1599 = vsel %vm293, %v1598, %v1590
      %v1600 = vrot.slane %v1590, 4
      %v1601 = vsel %vm293, %v1594, %v1600
      %v1603 = vunpack.c.l.s4 1983009808
      %v1604 = vunpack.c.0.s8 %v1603
      %v1605 = vperm.slane %v1599, %v1604
      %v1607 = vunpack.c.l.s4 1983009808
      %v1608 = vunpack.c.0.s8 %v1607
      %v1609 = vperm.slane %v1601, %v1608
      %v1610 = vrot.slane %v1596, 4
      %v1611 = vsel %vm293, %v1610, %v1592
      %v1612 = vrot.slane %v1592, 4
      %v1613 = vsel %vm293, %v1596, %v1612
      %v1615 = vunpack.c.l.s4 1983009808
      %v1616 = vunpack.c.0.s8 %v1615
      %v1617 = vperm.slane %v1611, %v1616
      %v1619 = vunpack.c.l.s4 1983009808
      %v1620 = vunpack.c.0.s8 %v1619
      %v1621 = vperm.slane %v1613, %v1620
      %v1622 = vrot.slane %v1617, 4
      %v1623 = vsel %vm293, %v1622, %v1605
      %v1624 = vrot.slane %v1605, 4
      %v1625 = vsel %vm293, %v1617, %v1624
      %v1627 = vunpack.c.l.s4 1934713408
      %v1628 = vunpack.c.0.s8 %v1627
      %v1629 = vperm.slane %v1623, %v1628
      %v1631 = vunpack.c.l.s4 1934713408
      %v1632 = vunpack.c.0.s8 %v1631
      %v1633 = vperm.slane %v1625, %v1632
      %v1634 = vrot.slane %v1621, 4
      %v1635 = vsel %vm293, %v1634, %v1609
      %v1636 = vrot.slane %v1609, 4
      %v1637 = vsel %vm293, %v1621, %v1636
      %v1639 = vunpack.c.l.s4 1934713408
      %v1640 = vunpack.c.0.s8 %v1639
      %v1641 = vperm.slane %v1635, %v1640
      %v1643 = vunpack.c.l.s4 1934713408
      %v1644 = vunpack.c.0.s8 %v1643
      %v1645 = vperm.slane %v1637, %v1644
      %v1646 = vrot.slane %v1629, 4
      %v1647 = vsel %vm293, 0.0, %v1646
      %v1648 = vrot.slane %v1633, 4
      %v1649 = vsel %vm293, 0.0, %v1648
      %v1650 = vrot.slane %v1641, 4
      %v1651 = vsel %vm293, 0.0, %v1650
      %v1652 = vrot.slane %v1645, 4
      %v1653 = vsel %vm293, 0.0, %v1652
      %v1654 = vrot.slane %v1595, 4
      %v1655 = vsel %vm293, %v1654, %v1591
      %v1656 = vrot.slane %v1591, 4
      %v1657 = vsel %vm293, %v1595, %v1656
      %v1659 = vunpack.c.l.s4 1983009808
      %v1660 = vunpack.c.0.s8 %v1659
      %v1661 = vperm.slane %v1655, %v1660
      %v1663 = vunpack.c.l.s4 1983009808
      %v1664 = vunpack.c.0.s8 %v1663
      %v1665 = vperm.slane %v1657, %v1664
      %v1666 = vrot.slane %v1597, 4
      %v1667 = vsel %vm293, %v1666, %v1593
      %v1668 = vrot.slane %v1593, 4
      %v1669 = vsel %vm293, %v1597, %v1668
      %v1671 = vunpack.c.l.s4 1983009808
      %v1672 = vunpack.c.0.s8 %v1671
      %v1673 = vperm.slane %v1667, %v1672
      %v1675 = vunpack.c.l.s4 1983009808
      %v1676 = vunpack.c.0.s8 %v1675
      %v1677 = vperm.slane %v1669, %v1676
      %v1678 = vrot.slane %v1673, 4
      %v1679 = vsel %vm293, %v1678, %v1661
      %v1680 = vrot.slane %v1661, 4
      %v1681 = vsel %vm293, %v1673, %v1680
      %v1683 = vunpack.c.l.s4 1934713408
      %v1684 = vunpack.c.0.s8 %v1683
      %v1685 = vperm.slane %v1679, %v1684
      %v1687 = vunpack.c.l.s4 1934713408
      %v1688 = vunpack.c.0.s8 %v1687
      %v1689 = vperm.slane %v1681, %v1688
      %v1690 = vrot.slane %v1677, 4
      %v1691 = vsel %vm293, %v1690, %v1665
      %v1692 = vrot.slane %v1665, 4
      %v1693 = vsel %vm293, %v1677, %v1692
      %v1695 = vunpack.c.l.s4 1934713408
      %v1696 = vunpack.c.0.s8 %v1695
      %v1697 = vperm.slane %v1691, %v1696
      %v1699 = vunpack.c.l.s4 1934713408
      %v1700 = vunpack.c.0.s8 %v1699
      %v1701 = vperm.slane %v1693, %v1700
      %v1702 = vrot.slane %v1685, 4
      %v1703 = vsel %vm293, 0.0, %v1702
      %v1704 = vrot.slane %v1689, 4
      %v1705 = vsel %vm293, 0.0, %v1704
      %v1706 = vrot.slane %v1697, 4
      %v1707 = vsel %vm293, 0.0, %v1706
      %v1708 = vrot.slane %v1701, 4
      %v1709 = vsel %vm293, 0.0, %v1708
      %1711 = vrot.lane.b32.xlu0 %v1647, 16
      %v1712 = vpop.permute.xlu0 %1711
      %1715 = vrot.lane.b32.xlu0 %v1633, 32
      %v1716 = vpop.permute.xlu0 %1715
      %1719 = vrot.lane.b32.xlu0 %v1649, 48
      %v1720 = vpop.permute.xlu0 %1719
      %1723 = vrot.lane.b32.xlu0 %v1641, 64
      %v1724 = vpop.permute.xlu0 %1723
      %1727 = vrot.lane.b32.xlu0 %v1651, 80
      %v1728 = vpop.permute.xlu0 %1727
      %1731 = vrot.lane.b32.xlu0 %v1645, 96
      %v1732 = vpop.permute.xlu0 %1731
      %1735 = vrot.lane.b32.xlu0 %v1653, 112
      %v1736 = vpop.permute.xlu0 %1735
      %1739 = vrot.lane.b32.xlu0 %v1703, 16
      %v1740 = vpop.permute.xlu0 %1739
      %1743 = vrot.lane.b32.xlu0 %v1689, 32
      %v1744 = vpop.permute.xlu0 %1743
      %1747 = vrot.lane.b32.xlu0 %v1705, 48
      %v1748 = vpop.permute.xlu0 %1747
      %1751 = vrot.lane.b32.xlu0 %v1697, 64
      %v1752 = vpop.permute.xlu0 %1751
      %1755 = vrot.lane.b32.xlu0 %v1707, 80
      %v1756 = vpop.permute.xlu0 %1755
      %1759 = vrot.lane.b32.xlu0 %v1701, 96
      %v1760 = vpop.permute.xlu0 %1759
      %1763 = vrot.lane.b32.xlu0 %v1709, 112
      %v1764 = vpop.permute.xlu0 %1763
      %v1766 = vsel %vm461, %v1629, %v1712
      %v1767 = vsel %vm463, %v1766, %v1716
      %v1768 = vsel %vm465, %v1767, %v1720
      %v1769 = vsel %vm467, %v1768, %v1724
      %v1770 = vsel %vm469, %v1769, %v1728
      %v1771 = vsel %vm471, %v1770, %v1732
      %v1772 = vsel %vm473, %v1771, %v1736
      %v1773 = vsel %vm461, %v1685, %v1740
      %v1774 = vsel %vm463, %v1773, %v1744
      %v1775 = vsel %vm465, %v1774, %v1748
      %v1776 = vsel %vm467, %v1775, %v1752
      %v1777 = vsel %vm469, %v1776, %v1756
      %v1778 = vsel %vm471, %v1777, %v1760
      %v1779 = vsel %vm473, %v1778, %v1764
      %1780 = vst [vmem:[#allocation3 + $0x30] sm:$0xf] %v1772
      %1781 = vst [vmem:[#allocation3 + $0x38] sm:$0xf] %v1779
      %v1782 = vld [vmem:[#allocation2 + $0xa] sm:$0xff]
      %v1783 = vld [vmem:[#allocation2 + $0x12] sm:$0xff]
      %v1784 = vld [vmem:[#allocation2 + $0x2a] sm:$0xff]
      %v1785 = vld [vmem:[#allocation2 + $0x32] sm:$0xff]
      %v1786 = vld [vmem:[#allocation2 + $0x4a] sm:$0xff]
      %v1787 = vld [vmem:[#allocation2 + $0x52] sm:$0xff]
      %v1788 = vld [vmem:[#allocation2 + $0x6a] sm:$0xff]
      %v1789 = vld [vmem:[#allocation2 + $0x72] sm:$0xff]
      %1798 = vrot.lane.b32.xlu0 %v1782, 126
      %v1799 = vpop.permute.xlu0 %1798
      %1800 = vrot.lane.b32.xlu0 %v1783, 126
      %v1801 = vpop.permute.xlu0 %1800
      %1802 = vrot.lane.b32.xlu0 %v1784, 126
      %v1803 = vpop.permute.xlu0 %1802
      %1804 = vrot.lane.b32.xlu0 %v1785, 126
      %v1805 = vpop.permute.xlu0 %1804
      %1806 = vrot.lane.b32.xlu0 %v1786, 126
      %v1807 = vpop.permute.xlu0 %1806
      %1808 = vrot.lane.b32.xlu0 %v1787, 126
      %v1809 = vpop.permute.xlu0 %1808
      %1810 = vrot.lane.b32.xlu0 %v1788, 126
      %v1811 = vpop.permute.xlu0 %1810
      %1812 = vrot.lane.b32.xlu0 %v1789, 126
      %v1813 = vpop.permute.xlu0 %1812
      %v1822 = vrot.slane %v1807, 4
      %v1823 = vsel %vm293, %v1822, %v1799
      %v1824 = vrot.slane %v1799, 4
      %v1825 = vsel %vm293, %v1807, %v1824
      %v1827 = vunpack.c.l.s4 1983009808
      %v1828 = vunpack.c.0.s8 %v1827
      %v1829 = vperm.slane %v1823, %v1828
      %v1831 = vunpack.c.l.s4 1983009808
      %v1832 = vunpack.c.0.s8 %v1831
      %v1833 = vperm.slane %v1825, %v1832
      %v1834 = vrot.slane %v1811, 4
      %v1835 = vsel %vm293, %v1834, %v1803
      %v1836 = vrot.slane %v1803, 4
      %v1837 = vsel %vm293, %v1811, %v1836
      %v1839 = vunpack.c.l.s4 1983009808
      %v1840 = vunpack.c.0.s8 %v1839
      %v1841 = vperm.slane %v1835, %v1840
      %v1843 = vunpack.c.l.s4 1983009808
      %v1844 = vunpack.c.0.s8 %v1843
      %v1845 = vperm.slane %v1837, %v1844
      %v1846 = vrot.slane %v1841, 4
      %v1847 = vsel %vm293, %v1846, %v1829
      %v1848 = vrot.slane %v1829, 4
      %v1849 = vsel %vm293, %v1841, %v1848
      %v1851 = vunpack.c.l.s4 1934713408
      %v1852 = vunpack.c.0.s8 %v1851
      %v1853 = vperm.slane %v1847, %v1852
      %v1855 = vunpack.c.l.s4 1934713408
      %v1856 = vunpack.c.0.s8 %v1855
      %v1857 = vperm.slane %v1849, %v1856
      %v1858 = vrot.slane %v1845, 4
      %v1859 = vsel %vm293, %v1858, %v1833
      %v1860 = vrot.slane %v1833, 4
      %v1861 = vsel %vm293, %v1845, %v1860
      %v1863 = vunpack.c.l.s4 1934713408
      %v1864 = vunpack.c.0.s8 %v1863
      %v1865 = vperm.slane %v1859, %v1864
      %v1867 = vunpack.c.l.s4 1934713408
      %v1868 = vunpack.c.0.s8 %v1867
      %v1869 = vperm.slane %v1861, %v1868
      %v1870 = vrot.slane %v1853, 4
      %v1871 = vsel %vm293, 0.0, %v1870
      %v1872 = vrot.slane %v1857, 4
      %v1873 = vsel %vm293, 0.0, %v1872
      %v1874 = vrot.slane %v1865, 4
      %v1875 = vsel %vm293, 0.0, %v1874
      %v1876 = vrot.slane %v1869, 4
      %v1877 = vsel %vm293, 0.0, %v1876
      %v1878 = vrot.slane %v1809, 4
      %v1879 = vsel %vm293, %v1878, %v1801
      %v1880 = vrot.slane %v1801, 4
      %v1881 = vsel %vm293, %v1809, %v1880
      %v1883 = vunpack.c.l.s4 1983009808
      %v1884 = vunpack.c.0.s8 %v1883
      %v1885 = vperm.slane %v1879, %v1884
      %v1887 = vunpack.c.l.s4 1983009808
      %v1888 = vunpack.c.0.s8 %v1887
      %v1889 = vperm.slane %v1881, %v1888
      %v1890 = vrot.slane %v1813, 4
      %v1891 = vsel %vm293, %v1890, %v1805
      %v1892 = vrot.slane %v1805, 4
      %v1893 = vsel %vm293, %v1813, %v1892
      %v1895 = vunpack.c.l.s4 1983009808
      %v1896 = vunpack.c.0.s8 %v1895
      %v1897 = vperm.slane %v1891, %v1896
      %v1899 = vunpack.c.l.s4 1983009808
      %v1900 = vunpack.c.0.s8 %v1899
      %v1901 = vperm.slane %v1893, %v1900
      %v1902 = vrot.slane %v1897, 4
      %v1903 = vsel %vm293, %v1902, %v1885
      %v1904 = vrot.slane %v1885, 4
      %v1905 = vsel %vm293, %v1897, %v1904
      %v1907 = vunpack.c.l.s4 1934713408
      %v1908 = vunpack.c.0.s8 %v1907
      %v1909 = vperm.slane %v1903, %v1908
      %v1911 = vunpack.c.l.s4 1934713408
      %v1912 = vunpack.c.0.s8 %v1911
      %v1913 = vperm.slane %v1905, %v1912
      %v1914 = vrot.slane %v1901, 4
      %v1915 = vsel %vm293, %v1914, %v1889
      %v1916 = vrot.slane %v1889, 4
      %v1917 = vsel %vm293, %v1901, %v1916
      %v1919 = vunpack.c.l.s4 1934713408
      %v1920 = vunpack.c.0.s8 %v1919
      %v1921 = vperm.slane %v1915, %v1920
      %v1923 = vunpack.c.l.s4 1934713408
      %v1924 = vunpack.c.0.s8 %v1923
      %v1925 = vperm.slane %v1917, %v1924
      %v1926 = vrot.slane %v1909, 4
      %v1927 = vsel %vm293, 0.0, %v1926
      %v1928 = vrot.slane %v1913, 4
      %v1929 = vsel %vm293, 0.0, %v1928
      %v1930 = vrot.slane %v1921, 4
      %v1931 = vsel %vm293, 0.0, %v1930
      %v1932 = vrot.slane %v1925, 4
      %v1933 = vsel %vm293, 0.0, %v1932
      %1935 = vrot.lane.b32.xlu0 %v1871, 16
      %v1936 = vpop.permute.xlu0 %1935
      %1939 = vrot.lane.b32.xlu0 %v1857, 32
      %v1940 = vpop.permute.xlu0 %1939
      %1943 = vrot.lane.b32.xlu0 %v1873, 48
      %v1944 = vpop.permute.xlu0 %1943
      %1947 = vrot.lane.b32.xlu0 %v1865, 64
      %v1948 = vpop.permute.xlu0 %1947
      %1951 = vrot.lane.b32.xlu0 %v1875, 80
      %v1952 = vpop.permute.xlu0 %1951
      %1955 = vrot.lane.b32.xlu0 %v1869, 96
      %v1956 = vpop.permute.xlu0 %1955
      %1959 = vrot.lane.b32.xlu0 %v1877, 112
      %v1960 = vpop.permute.xlu0 %1959
      %1963 = vrot.lane.b32.xlu0 %v1927, 16
      %v1964 = vpop.permute.xlu0 %1963
      %1967 = vrot.lane.b32.xlu0 %v1913, 32
      %v1968 = vpop.permute.xlu0 %1967
      %1971 = vrot.lane.b32.xlu0 %v1929, 48
      %v1972 = vpop.permute.xlu0 %1971
      %1975 = vrot.lane.b32.xlu0 %v1921, 64
      %v1976 = vpop.permute.xlu0 %1975
      %1979 = vrot.lane.b32.xlu0 %v1931, 80
      %v1980 = vpop.permute.xlu0 %1979
      %1983 = vrot.lane.b32.xlu0 %v1925, 96
      %v1984 = vpop.permute.xlu0 %1983
      %1987 = vrot.lane.b32.xlu0 %v1933, 112
      %v1988 = vpop.permute.xlu0 %1987
      %v1990 = vsel %vm461, %v1853, %v1936
      %v1991 = vsel %vm463, %v1990, %v1940
      %v1992 = vsel %vm465, %v1991, %v1944
      %v1993 = vsel %vm467, %v1992, %v1948
      %v1994 = vsel %vm469, %v1993, %v1952
      %v1995 = vsel %vm471, %v1994, %v1956
      %v1996 = vsel %vm473, %v1995, %v1960
      %v1997 = vsel %vm461, %v1909, %v1964
      %v1998 = vsel %vm463, %v1997, %v1968
      %v1999 = vsel %vm465, %v1998, %v1972
      %v2000 = vsel %vm467, %v1999, %v1976
      %v2001 = vsel %vm469, %v2000, %v1980
      %v2002 = vsel %vm471, %v2001, %v1984
      %v2003 = vsel %vm473, %v2002, %v1988
      %v2006 = vrot.slane %v1996, 4
      %v2007 = vrot.slane %v2003, 4
      %2010 = vst [vmem:[#allocation3 + $0x30] sm:$0xf0] %v2006
      %2011 = vst [vmem:[#allocation3 + $0x38] sm:$0xf0] %v2007
      %v2012 = vld [vmem:[#allocation2 + $0xa] sm:$0xff]
      %v2013 = vld [vmem:[#allocation2 + $0x12] sm:$0xff]
      %v2014 = vld [vmem:[#allocation2 + $0x2a] sm:$0xff]
      %v2015 = vld [vmem:[#allocation2 + $0x32] sm:$0xff]
      %v2016 = vld [vmem:[#allocation2 + $0x4a] sm:$0xff]
      %v2017 = vld [vmem:[#allocation2 + $0x52] sm:$0xff]
      %v2018 = vld [vmem:[#allocation2 + $0x6a] sm:$0xff]
      %v2019 = vld [vmem:[#allocation2 + $0x72] sm:$0xff]
      %2028 = vrot.lane.b32.xlu0 %v2012, 124
      %v2029 = vpop.permute.xlu0 %2028
      %2030 = vrot.lane.b32.xlu0 %v2013, 124
      %v2031 = vpop.permute.xlu0 %2030
      %2032 = vrot.lane.b32.xlu0 %v2014, 124
      %v2033 = vpop.permute.xlu0 %2032
      %2034 = vrot.lane.b32.xlu0 %v2015, 124
      %v2035 = vpop.permute.xlu0 %2034
      %2036 = vrot.lane.b32.xlu0 %v2016, 124
      %v2037 = vpop.permute.xlu0 %2036
      %2038 = vrot.lane.b32.xlu0 %v2017, 124
      %v2039 = vpop.permute.xlu0 %2038
      %2040 = vrot.lane.b32.xlu0 %v2018, 124
      %v2041 = vpop.permute.xlu0 %2040
      %2042 = vrot.lane.b32.xlu0 %v2019, 124
      %v2043 = vpop.permute.xlu0 %2042
      %v2052 = vrot.slane %v2037, 4
      %v2053 = vsel %vm293, %v2052, %v2029
      %v2054 = vrot.slane %v2029, 4
      %v2055 = vsel %vm293, %v2037, %v2054
      %v2057 = vunpack.c.l.s4 1983009808
      %v2058 = vunpack.c.0.s8 %v2057
      %v2059 = vperm.slane %v2053, %v2058
      %v2061 = vunpack.c.l.s4 1983009808
      %v2062 = vunpack.c.0.s8 %v2061
      %v2063 = vperm.slane %v2055, %v2062
      %v2064 = vrot.slane %v2041, 4
      %v2065 = vsel %vm293, %v2064, %v2033
      %v2066 = vrot.slane %v2033, 4
      %v2067 = vsel %vm293, %v2041, %v2066
      %v2069 = vunpack.c.l.s4 1983009808
      %v2070 = vunpack.c.0.s8 %v2069
      %v2071 = vperm.slane %v2065, %v2070
      %v2073 = vunpack.c.l.s4 1983009808
      %v2074 = vunpack.c.0.s8 %v2073
      %v2075 = vperm.slane %v2067, %v2074
      %v2076 = vrot.slane %v2071, 4
      %v2077 = vsel %vm293, %v2076, %v2059
      %v2078 = vrot.slane %v2059, 4
      %v2079 = vsel %vm293, %v2071, %v2078
      %v2081 = vunpack.c.l.s4 1934713408
      %v2082 = vunpack.c.0.s8 %v2081
      %v2083 = vperm.slane %v2077, %v2082
      %v2085 = vunpack.c.l.s4 1934713408
      %v2086 = vunpack.c.0.s8 %v2085
      %v2087 = vperm.slane %v2079, %v2086
      %v2088 = vrot.slane %v2075, 4
      %v2089 = vsel %vm293, %v2088, %v2063
      %v2090 = vrot.slane %v2063, 4
      %v2091 = vsel %vm293, %v2075, %v2090
      %v2093 = vunpack.c.l.s4 1934713408
      %v2094 = vunpack.c.0.s8 %v2093
      %v2095 = vperm.slane %v2089, %v2094
      %v2097 = vunpack.c.l.s4 1934713408
      %v2098 = vunpack.c.0.s8 %v2097
      %v2099 = vperm.slane %v2091, %v2098
      %v2100 = vrot.slane %v2083, 4
      %v2101 = vsel %vm293, 0.0, %v2100
      %v2102 = vrot.slane %v2087, 4
      %v2103 = vsel %vm293, 0.0, %v2102
      %v2104 = vrot.slane %v2095, 4
      %v2105 = vsel %vm293, 0.0, %v2104
      %v2106 = vrot.slane %v2099, 4
      %v2107 = vsel %vm293, 0.0, %v2106
      %v2108 = vrot.slane %v2039, 4
      %v2109 = vsel %vm293, %v2108, %v2031
      %v2110 = vrot.slane %v2031, 4
      %v2111 = vsel %vm293, %v2039, %v2110
      %v2113 = vunpack.c.l.s4 1983009808
      %v2114 = vunpack.c.0.s8 %v2113
      %v2115 = vperm.slane %v2109, %v2114
      %v2117 = vunpack.c.l.s4 1983009808
      %v2118 = vunpack.c.0.s8 %v2117
      %v2119 = vperm.slane %v2111, %v2118
      %v2120 = vrot.slane %v2043, 4
      %v2121 = vsel %vm293, %v2120, %v2035
      %v2122 = vrot.slane %v2035, 4
      %v2123 = vsel %vm293, %v2043, %v2122
      %v2125 = vunpack.c.l.s4 1983009808
      %v2126 = vunpack.c.0.s8 %v2125
      %v2127 = vperm.slane %v2121, %v2126
      %v2129 = vunpack.c.l.s4 1983009808
      %v2130 = vunpack.c.0.s8 %v2129
      %v2131 = vperm.slane %v2123, %v2130
      %v2132 = vrot.slane %v2127, 4
      %v2133 = vsel %vm293, %v2132, %v2115
      %v2134 = vrot.slane %v2115, 4
      %v2135 = vsel %vm293, %v2127, %v2134
      %v2137 = vunpack.c.l.s4 1934713408
      %v2138 = vunpack.c.0.s8 %v2137
      %v2139 = vperm.slane %v2133, %v2138
      %v2141 = vunpack.c.l.s4 1934713408
      %v2142 = vunpack.c.0.s8 %v2141
      %v2143 = vperm.slane %v2135, %v2142
      %v2144 = vrot.slane %v2131, 4
      %v2145 = vsel %vm293, %v2144, %v2119
      %v2146 = vrot.slane %v2119, 4
      %v2147 = vsel %vm293, %v2131, %v2146
      %v2149 = vunpack.c.l.s4 1934713408
      %v2150 = vunpack.c.0.s8 %v2149
      %v2151 = vperm.slane %v2145, %v2150
      %v2153 = vunpack.c.l.s4 1934713408
      %v2154 = vunpack.c.0.s8 %v2153
      %v2155 = vperm.slane %v2147, %v2154
      %v2156 = vrot.slane %v2139, 4
      %v2157 = vsel %vm293, 0.0, %v2156
      %v2158 = vrot.slane %v2143, 4
      %v2159 = vsel %vm293, 0.0, %v2158
      %v2160 = vrot.slane %v2151, 4
      %v2161 = vsel %vm293, 0.0, %v2160
      %v2162 = vrot.slane %v2155, 4
      %v2163 = vsel %vm293, 0.0, %v2162
      %2165 = vrot.lane.b32.xlu0 %v2101, 16
      %v2166 = vpop.permute.xlu0 %2165
      %2169 = vrot.lane.b32.xlu0 %v2087, 32
      %v2170 = vpop.permute.xlu0 %2169
      %2173 = vrot.lane.b32.xlu0 %v2103, 48
      %v2174 = vpop.permute.xlu0 %2173
      %2177 = vrot.lane.b32.xlu0 %v2095, 64
      %v2178 = vpop.permute.xlu0 %2177
      %2181 = vrot.lane.b32.xlu0 %v2105, 80
      %v2182 = vpop.permute.xlu0 %2181
      %2185 = vrot.lane.b32.xlu0 %v2099, 96
      %v2186 = vpop.permute.xlu0 %2185
      %2189 = vrot.lane.b32.xlu0 %v2107, 112
      %v2190 = vpop.permute.xlu0 %2189
      %2193 = vrot.lane.b32.xlu0 %v2157, 16
      %v2194 = vpop.permute.xlu0 %2193
      %2197 = vrot.lane.b32.xlu0 %v2143, 32
      %v2198 = vpop.permute.xlu0 %2197
      %2201 = vrot.lane.b32.xlu0 %v2159, 48
      %v2202 = vpop.permute.xlu0 %2201
      %2205 = vrot.lane.b32.xlu0 %v2151, 64
      %v2206 = vpop.permute.xlu0 %2205
      %2209 = vrot.lane.b32.xlu0 %v2161, 80
      %v2210 = vpop.permute.xlu0 %2209
      %2213 = vrot.lane.b32.xlu0 %v2155, 96
      %v2214 = vpop.permute.xlu0 %2213
      %2217 = vrot.lane.b32.xlu0 %v2163, 112
      %v2218 = vpop.permute.xlu0 %2217
      %v2220 = vsel %vm461, %v2083, %v2166
      %v2221 = vsel %vm463, %v2220, %v2170
      %v2222 = vsel %vm465, %v2221, %v2174
      %v2223 = vsel %vm467, %v2222, %v2178
      %v2224 = vsel %vm469, %v2223, %v2182
      %v2225 = vsel %vm471, %v2224, %v2186
      %v2226 = vsel %vm473, %v2225, %v2190
      %v2227 = vsel %vm461, %v2139, %v2194
      %v2228 = vsel %vm463, %v2227, %v2198
      %v2229 = vsel %vm465, %v2228, %v2202
      %v2230 = vsel %vm467, %v2229, %v2206
      %v2231 = vsel %vm469, %v2230, %v2210
      %v2232 = vsel %vm471, %v2231, %v2214
      %v2233 = vsel %vm473, %v2232, %v2218
      %2234 = vst [vmem:[#allocation3 + $0x40] sm:$0xf] %v2226
      %2235 = vst [vmem:[#allocation3 + $0x48] sm:$0xf] %v2233
      %v2236 = vld [vmem:[%s1] sm:$0xff]
      %v2237 = vld [vmem:[#allocation3] sm:$0xff]
      %v2238 = vld [vmem:[#allocation3 + $0x8] sm:$0xff]
      %v2239 = vld [vmem:[#allocation3 + $0x10] sm:$0xff]
      %v2240 = vld [vmem:[#allocation3 + $0x18] sm:$0xff]
      %v2241 = vld [vmem:[#allocation3 + $0x20] sm:$0xff]
      %v2242 = vld [vmem:[#allocation3 + $0x28] sm:$0xff]
      %v2243 = vld [vmem:[#allocation3 + $0x30] sm:$0xff]
      %v2244 = vld [vmem:[#allocation3 + $0x38] sm:$0xff]
      %v2245 = vld [vmem:[#allocation3 + $0x40] sm:$0xf]
      %v2246 = vld [vmem:[#allocation3 + $0x48] sm:$0xf]
      %vm2247 = vcmask 293888
      %v2249 = vsel %vm2247, %v2236, 0
      %vm2251 = vcmask 1043456
      %v2253 = vsel %vm2251, %v2245, 0
      %v2256 = vsel %vm2251, %v2246, 0
      %2258 = vmatpush.msra.mxu0 0.0
      %2259 = vmatpush.msra.mxu0 0.0
      %2260 = vmatpush.msra.mxu0 0.0
      %2261 = vmatpush.msra.mxu0 0.0
      %2262 = vmatpush.msra.mxu0 0.0
      %2263 = vmatpush.msra.mxu0 0.0
      %2264 = vmatpush.msra.mxu0 0.0
      %2265 = vmatpush.msra.mxu0 0.0
      %2266 = vmatpush.msra.mxu0 0.0
      %2267 = vmatpush.msra.mxu0 0.0
      %2268 = vmatpush.msra.mxu0 0.0
      %2269 = vmatpush.msra.mxu0 %v2253
      %2270 = vmatpush.msra.mxu0 %v2243
      %2271 = vmatpush.msra.mxu0 %v2241
      %2272 = vmatpush.msra.mxu0 %v2239
      %2273 = vmatpush.msra.mxu0 %v2237
      %2274 = vmatmul.f32.gmra.mxu0 %v2249
      %v2275 = vpop.f32.mrf.mxu0
      %v2276 = vadd.f32 0.0, %v2275
      %2277 = vdwg.mxu0
      %2278 = vmatpush.msra.mxu0 0.0
      %2279 = vmatpush.msra.mxu0 0.0
      %2280 = vmatpush.msra.mxu0 0.0
      %2281 = vmatpush.msra.mxu0 0.0
      %2282 = vmatpush.msra.mxu0 0.0
      %2283 = vmatpush.msra.mxu0 0.0
      %2284 = vmatpush.msra.mxu0 0.0
      %2285 = vmatpush.msra.mxu0 0.0
      %2286 = vmatpush.msra.mxu0 0.0
      %2287 = vmatpush.msra.mxu0 0.0
      %2288 = vmatpush.msra.mxu0 0.0
      %2289 = vmatpush.msra.mxu0 %v2256
      %2290 = vmatpush.msra.mxu0 %v2244
      %2291 = vmatpush.msra.mxu0 %v2242
      %2292 = vmatpush.msra.mxu0 %v2240
      %2293 = vmatpush.msra.mxu0 %v2238
      %2294 = vmatmul.f32.gmra.mxu0 %v2249
      %v2295 = vpop.f32.mrf.mxu0
      %v2296 = vadd.f32 0.0, %v2295
      %2297 = vdwg.mxu0
      %2298 = vst [vmem:[%s177] sm:$0xff] %v2276
      %2299 = vst [vmem:[%s177 + $0x8] sm:$0xff] %v2296
      %v2300 = vadd.f32 %v2276, %v2296
      %2301 = vadd.xlane.f32.xlu0 %v2300
      %v2302 = vpop.xlane.xlu0 %2301
      %v2303 = vmul.f32 %v2276, %v2276
      %v2304 = vmul.f32 %v2296, %v2296
      %v2305 = vadd.f32 %v2303, %v2304
      %2306 = vadd.xlane.f32.xlu0 %v2305
      %v2307 = vpop.xlane.xlu0 %2306
      %vm2308 = vcmask 7168
      %v2309 = vsel %vm2308, %v2302, %v2307
      %2310 = vst.msk [vmem:[%s181] sm:$0xff] %vm191, %v2309
      %p2311 = scmp.lt.s32.totalorder %s15, 1
      %s2312 = scalar_select %p2311, %s15, 1
      %s2313 = smul.addr %s2312, 2
      %s2314 = smul.addr %s2313, 8
      %s2315 = scalar_lea.vmem %s2, %s2314
      %p2316 = scmp.lt.s32.totalorder %s15, 1
      %s2317 = scalar_select %p2316, %s15, 1
      %s2318 = smul.addr %s2317, 8
      %s2319 = scalar_lea.vmem %s3, %s2318
      // Predicated region
      $region29: #{_dilconv_forward.2} parent=27 // pred_check
        %p2320 = pneg %p80
      $region30: #{_dilconv_forward.2} parent=27 // pred_check_branch
        %2322 = sbr.rel (%p2320) target = $region32
      $region31: #{_dilconv_forward.2} parent=27 // pred_region
        _
      $region32: #{_dilconv_forward.2} parent=27 // pred_fallthru
        _
      // Predicated region
      $region33: #{_dilconv_forward.2} parent=27 // pred_check
        %p2323 = pneg %p106
      $region34: #{_dilconv_forward.2} parent=27 // pred_check_branch
        %2325 = sbr.rel (%p2323) target = $region36
      $region35: #{_dilconv_forward.2} parent=27 // pred_region
        _
      $region36: #{_dilconv_forward.2} parent=27 // pred_fallthru
        _
    $region28: #{_dilconv_forward.2} parent=5 // pred_fallthru
      _
    %p2326 = scmp.le.s32.totalorder 2, %s10
    // Predicated region
    $region37: #{_dilconv_forward.2} parent=5 // pred_check
      %p2327 = pneg %p2326
    $region38: #{_dilconv_forward.2} parent=5 // pred_check_branch
      %2329 = sbr.rel (%p2327) target = $region40
    $region39: #{_dilconv_forward.2} parent=5 // pred_region
      %s2330 = ssub.s32 %s10, 2
      // Predicated region
      $region41: #{_dilconv_forward.2} parent=39 // pred_check
        %p2331 = pneg %p86
      $region42: #{_dilconv_forward.2} parent=39 // pred_check_branch
        %2333 = sbr.rel (%p2331) target = $region44
      $region43: #{_dilconv_forward.2} parent=39 // pred_region
        %p2334 = scmp.lt.s32.totalorder %s16, 1
        %s2335 = scalar_select %p2334, %s16, 1
        %s2336 = smul.addr %s2335, 2
        %s2337 = smul.addr %s2336, 8
        %s2338 = scalar_lea.vmem %s2, %s2337
      $region44: #{_dilconv_forward.2} parent=39 // pred_fallthru
        _
      // Predicated region
      $region45: #{_dilconv_forward.2} parent=39 // pred_check
        %p2339 = pneg %p112
      $region46: #{_dilconv_forward.2} parent=39 // pred_check_branch
        %2341 = sbr.rel (%p2339) target = $region48
      $region47: #{_dilconv_forward.2} parent=39 // pred_region
        %p2342 = scmp.lt.s32.totalorder %s16, 1
        %s2343 = scalar_select %p2342, %s16, 1
        %s2344 = smul.addr %s2343, 8
        %s2345 = scalar_lea.vmem %s3, %s2344
      $region48: #{_dilconv_forward.2} parent=39 // pred_fallthru
        _
    $region40: #{_dilconv_forward.2} parent=5 // pred_fallthru
      _
  $region6: #{_dilconv_forward.2} parent=0 // loop_footer
    %s14 = sadd.s32 1, %s10
  $region7: #{_dilconv_forward.2} parent=0 // loop_footer_branch
    %9 = sbr.rel target = $region3
  $region8: #{_dilconv_forward.2} parent=0 // loop_exit
    _

</llo_original>
